<compile_context>
chip_gen: v7x
topology: tpu7x:2x2x1
jax: 0.10.0
libtpu: 0.0.40
codegen_flags: <defaults>
</compile_context>

<pallas_src>
import functools

import numpy as np
import jax
import jax.numpy as jnp
from jax import lax
from jax.experimental import pallas as pl
from jax.experimental.pallas import tpu as pltpu


def ode_rk4_kernel(x_ref, u_ref, ut_ref, p_ref, out_ref, *, n_steps):
    """One grid point = one batch tile. The full time integration runs inside
    the kernel; the reduced state h is carried as the fori_loop value.

    x_ref:   (tb, x_dim)            input batch tile
    u_ref:   (x_dim, r_pad)         projection basis (lane-padded)
    ut_ref:  (r_pad, x_dim)         precomputed U.T (lane-padded rows)
    p_ref:   (n_steps, r_pad, r_pad) per-step RK4 propagators
    out_ref: (tb, T, x_dim)         batch-major output slab
    """
    ut = ut_ref[...]

    # h0 = X @ U  (projection onto reduced basis); y0 = h0 @ U.T
    h0 = jnp.dot(x_ref[...], u_ref[...], preferred_element_type=jnp.float32)
    y0 = jnp.dot(h0, ut, preferred_element_type=jnp.float32)
    out_ref[:, 0:1, :] = y0[:, None, :].astype(out_ref.dtype)

    def body(j, h):
        # exact classical-RK4 step for the linear ODE: h <- h @ P_j
        h = jnp.dot(h, p_ref[j], preferred_element_type=jnp.float32)
        y = jnp.dot(h, ut, preferred_element_type=jnp.float32)
        out_ref[:, pl.ds(j + 1, 1), :] = y[:, None, :].astype(out_ref.dtype)
        return h

    if n_steps > 0:
        lax.fori_loop(0, n_steps, body, h0, unroll=True)


def ode_model_forward(X, U, B, t, *, tb=None):
    """OdeModel.forward (batch-training branch, method='rk4') on TPU."""
    batch, x_dim = X.shape
    r = U.shape[1]
    T = int(t.shape[0])
    assert T >= 1

    # --- lane-pad the reduced dimension to a full 128-lane width -------------
    r_pad = ((r + 127) // 128) * 128
    U_p = jnp.zeros((x_dim, r_pad), jnp.float32).at[:, :r].set(U.astype(jnp.float32))
    B_p = jnp.zeros((r_pad, r_pad), jnp.float32).at[:r, :r].set(B.astype(jnp.float32))
    U_T = jnp.swapaxes(U_p, 0, 1)                       # (r_pad, x_dim)

    # --- batch tile: whole batch (sublane-rounded), capped at 128 ------------
    if tb is None:
        tb = min(128, ((batch + 7) // 8) * 8)
    batch_pad = ((batch + tb - 1) // tb) * tb
    if batch_pad != batch:
        X_p = jnp.zeros((batch_pad, x_dim), X.dtype).at[:batch].set(X)
    else:
        X_p = X

    # --- per-step RK4 propagator (linear, constant-coefficient ODE) ----------
    # P_k = I + A + A^2/2 + A^3/6 + A^4/24,  A = dt_k * B   (exactly RK4)
    n_steps = T - 1
    if n_steps > 0:
        dt = (t[1:] - t[:-1]).astype(jnp.float32)       # (T-1,)
        A = dt[:, None, None] * B_p[None, :, :]         # (T-1, r_pad, r_pad)
        A2 = A @ A
        A3 = A2 @ A
        A4 = A3 @ A
        eye = jnp.eye(r_pad, dtype=jnp.float32)
        P = eye + A + A2 / 2.0 + A3 / 6.0 + A4 / 24.0
    else:
        P = jnp.eye(r_pad, dtype=jnp.float32)[None]     # placeholder, unused

    kernel = functools.partial(ode_rk4_kernel, n_steps=n_steps)

    y = pl.pallas_call(
        kernel,
        out_shape=jax.ShapeDtypeStruct((batch_pad, T, x_dim), X.dtype),
        grid=(batch_pad // tb,),
        in_specs=[
            pl.BlockSpec((tb, x_dim), lambda i: (i, 0)),           # X tile
            pl.BlockSpec((x_dim, r_pad), lambda i: (0, 0)),        # U (full)
            pl.BlockSpec((r_pad, x_dim), lambda i: (0, 0)),        # U.T (full)
            pl.BlockSpec((P.shape[0], r_pad, r_pad), lambda i: (0, 0, 0)),  # P
        ],
        out_specs=pl.BlockSpec((tb, T, x_dim), lambda i: (i, 0, 0)),
        compiler_params=pltpu.CompilerParams(
            dimension_semantics=("parallel",)),  # megacore on v7x when >1 tile
    )(X_p, U_p, U_T, P)

    return y[:batch]


def ode_model_forward_ref(X, U, B, t):
    """Pure-JAX reference (fixed-grid RK4, k1..k4 chain), for validation."""
    h = X @ U
    ys = [h]
    for k in range(1, t.shape[0]):
        dt = t[k] - t[k - 1]
        k1 = h @ B
        k2 = (h + 0.5 * dt * k1) @ B
        k3 = (h + 0.5 * dt * k2) @ B
        k4 = (h + dt * k3) @ B
        h = h + (dt / 6.0) * (k1 + 2.0 * k2 + 2.0 * k3 + k4)
        ys.append(h)
    y = jnp.stack(ys, axis=0)                    # (T, batch, r)
    return jnp.transpose(y, (1, 0, 2)) @ U.T     # (batch, T, x_dim)


if __name__ == "__main__":
    batch, x_dim, r, T = 16, 128, 32, 8

    key = jax.random.PRNGKey(0)
    kx, ku, kw = jax.random.split(key, 3)

    X = jax.random.normal(kx, (batch, x_dim), dtype=jnp.float32)
    U = jax.random.normal(ku, (x_dim, r), dtype=jnp.float32) / jnp.sqrt(x_dim)
    W = jax.random.normal(kw, (r, r), dtype=jnp.float32) / jnp.sqrt(r)
    # func.update_B(): deterministic synthetic parameterization -> skew-symmetric
    # dynamics matrix (stable, rotation-like ODE).
    B = W - W.T
    # t_batch: fixed integration grid (batch-training branch of forward)
    t = jnp.linspace(0.0, 1.0, T).astype(jnp.float32)

    y = ode_model_forward(X, U, B, t)
    jax.block_until_ready(y)

    y_ref = ode_model_forward_ref(X, U, B, t)
    assert y.shape == (batch, T, x_dim)
    err = np.max(np.abs(np.asarray(y) - np.asarray(y_ref)))
    assert np.allclose(np.asarray(y), np.asarray(y_ref), rtol=1e-3, atol=1e-3), err

    print("KERNEL_OK")
</pallas_src>

<mosaic_0001>
module attributes {stable_mosaic.version = 11 : i64} {
  func.func @ode_rk4_kernel(%arg0: i32, %arg1: memref<16x128xf32, #tpu.memory_space<vmem>>, %arg2: memref<128x128xf32, #tpu.memory_space<vmem>>, %arg3: memref<128x128xf32, #tpu.memory_space<vmem>>, %arg4: memref<7x128x128xf32, #tpu.memory_space<vmem>>, %arg5: memref<16x8x128xf32, #tpu.memory_space<vmem>>) attributes {dimension_semantics = [#tpu.dimension_semantics<parallel>], iteration_bounds = array<i64: 1>, scalar_prefetch = 0 : i64, scratch_operands = 0 : i64, tpu.core_type = #tpu.core_type<tc>, window_params = [{transform_indices = @transform_0, window_bounds = array<i64: 16, 128>}, {pipeline_mode = #tpu.pipeline_mode<synchronous>, transform_indices = @transform_1, window_bounds = array<i64: 128, 128>}, {pipeline_mode = #tpu.pipeline_mode<synchronous>, transform_indices = @transform_2, window_bounds = array<i64: 128, 128>}, {pipeline_mode = #tpu.pipeline_mode<synchronous>, transform_indices = @transform_3, window_bounds = array<i64: 7, 128, 128>}, {transform_indices = @transform_4, window_bounds = array<i64: 16, 8, 128>}]} {
    %c0 = arith.constant 0 : index
    %c0_0 = arith.constant 0 : index
    %0 = vector.load %arg3[%c0, %c0_0] : memref<128x128xf32, #tpu.memory_space<vmem>>, vector<128x128xf32>
    %c0_1 = arith.constant 0 : index
    %c0_2 = arith.constant 0 : index
    %1 = vector.load %arg1[%c0_1, %c0_2] : memref<16x128xf32, #tpu.memory_space<vmem>>, vector<16x128xf32>
    %c0_3 = arith.constant 0 : index
    %c0_4 = arith.constant 0 : index
    %2 = vector.load %arg2[%c0_3, %c0_4] : memref<128x128xf32, #tpu.memory_space<vmem>>, vector<128x128xf32>
    %cst = arith.constant dense<0.000000e+00> : vector<16x128xf32>
    %3 = tpu.matmul %1, %2, %cst {dimension_numbers = #tpu.dot_dimension_numbers<[1], [0], [0], [1], [0, 0, 1, 1], [], []>} : vector<16x128xf32>, vector<128x128xf32>, vector<16x128xf32> -> vector<16x128xf32>
    %cst_5 = arith.constant dense<0.000000e+00> : vector<16x128xf32>
    %4 = tpu.matmul %3, %0, %cst_5 {dimension_numbers = #tpu.dot_dimension_numbers<[1], [0], [0], [1], [0, 0, 1, 1], [], []>} : vector<16x128xf32>, vector<128x128xf32>, vector<16x128xf32> -> vector<16x128xf32>
    %5 = vector.shape_cast %4 : vector<16x128xf32> to vector<16x1x128xf32>
    %c0_6 = arith.constant 0 : index
    %c0_7 = arith.constant 0 : index
    %c0_8 = arith.constant 0 : index
    %6 = vector.load %arg5[%c0_6, %c0_7, %c0_8] : memref<16x8x128xf32, #tpu.memory_space<vmem>>, vector<16x1x128xf32>
    tpu.vector_store %arg5[%c0_6, %c0_7, %c0_8], %5 {strides = array<i32>} : memref<16x8x128xf32, #tpu.memory_space<vmem>>, vector<16x1x128xf32>,
    %c0_i32 = arith.constant 0 : i32
    %7 = arith.index_cast %c0_i32 : i32 to index
    %c0_9 = arith.constant 0 : index
    %c0_10 = arith.constant 0 : index
    %8 = vector.load %arg4[%7, %c0_9, %c0_10] : memref<7x128x128xf32, #tpu.memory_space<vmem>>, vector<1x128x128xf32>
    %9 = vector.shape_cast %8 : vector<1x128x128xf32> to vector<128x128xf32>
    %cst_11 = arith.constant dense<0.000000e+00> : vector<16x128xf32>
    %10 = tpu.matmul %3, %9, %cst_11 {dimension_numbers = #tpu.dot_dimension_numbers<[1], [0], [0], [1], [0, 0, 1, 1], [], []>} : vector<16x128xf32>, vector<128x128xf32>, vector<16x128xf32> -> vector<16x128xf32>
    %cst_12 = arith.constant dense<0.000000e+00> : vector<16x128xf32>
    %11 = tpu.matmul %10, %0, %cst_12 {dimension_numbers = #tpu.dot_dimension_numbers<[1], [0], [0], [1], [0, 0, 1, 1], [], []>} : vector<16x128xf32>, vector<128x128xf32>, vector<16x128xf32> -> vector<16x128xf32>
    %12 = vector.shape_cast %11 : vector<16x128xf32> to vector<16x1x128xf32>
    %c1_i32 = arith.constant 1 : i32
    %13 = arith.addi %c0_i32, %c1_i32 : i32
    %c0_13 = arith.constant 0 : index
    %14 = arith.index_cast %13 : i32 to index
    %c0_14 = arith.constant 0 : index
    %15 = vector.load %arg5[%c0_13, %14, %c0_14] : memref<16x8x128xf32, #tpu.memory_space<vmem>>, vector<16x1x128xf32>
    tpu.vector_store %arg5[%c0_13, %14, %c0_14], %12 {strides = array<i32>} : memref<16x8x128xf32, #tpu.memory_space<vmem>>, vector<16x1x128xf32>,
    %c1_i32_15 = arith.constant 1 : i32
    %16 = arith.index_cast %c1_i32_15 : i32 to index
    %c0_16 = arith.constant 0 : index
    %c0_17 = arith.constant 0 : index
    %17 = vector.load %arg4[%16, %c0_16, %c0_17] : memref<7x128x128xf32, #tpu.memory_space<vmem>>, vector<1x128x128xf32>
    %18 = vector.shape_cast %17 : vector<1x128x128xf32> to vector<128x128xf32>
    %cst_18 = arith.constant dense<0.000000e+00> : vector<16x128xf32>
    %19 = tpu.matmul %10, %18, %cst_18 {dimension_numbers = #tpu.dot_dimension_numbers<[1], [0], [0], [1], [0, 0, 1, 1], [], []>} : vector<16x128xf32>, vector<128x128xf32>, vector<16x128xf32> -> vector<16x128xf32>
    %cst_19 = arith.constant dense<0.000000e+00> : vector<16x128xf32>
    %20 = tpu.matmul %19, %0, %cst_19 {dimension_numbers = #tpu.dot_dimension_numbers<[1], [0], [0], [1], [0, 0, 1, 1], [], []>} : vector<16x128xf32>, vector<128x128xf32>, vector<16x128xf32> -> vector<16x128xf32>
    %21 = vector.shape_cast %20 : vector<16x128xf32> to vector<16x1x128xf32>
    %c1_i32_20 = arith.constant 1 : i32
    %22 = arith.addi %c1_i32_15, %c1_i32_20 : i32
    %c0_21 = arith.constant 0 : index
    %23 = arith.index_cast %22 : i32 to index
    %c0_22 = arith.constant 0 : index
    %24 = vector.load %arg5[%c0_21, %23, %c0_22] : memref<16x8x128xf32, #tpu.memory_space<vmem>>, vector<16x1x128xf32>
    tpu.vector_store %arg5[%c0_21, %23, %c0_22], %21 {strides = array<i32>} : memref<16x8x128xf32, #tpu.memory_space<vmem>>, vector<16x1x128xf32>,
    %c2_i32 = arith.constant 2 : i32
    %25 = arith.index_cast %c2_i32 : i32 to index
    %c0_23 = arith.constant 0 : index
    %c0_24 = arith.constant 0 : index
    %26 = vector.load %arg4[%25, %c0_23, %c0_24] : memref<7x128x128xf32, #tpu.memory_space<vmem>>, vector<1x128x128xf32>
    %27 = vector.shape_cast %26 : vector<1x128x128xf32> to vector<128x128xf32>
    %cst_25 = arith.constant dense<0.000000e+00> : vector<16x128xf32>
    %28 = tpu.matmul %19, %27, %cst_25 {dimension_numbers = #tpu.dot_dimension_numbers<[1], [0], [0], [1], [0, 0, 1, 1], [], []>} : vector<16x128xf32>, vector<128x128xf32>, vector<16x128xf32> -> vector<16x128xf32>
    %cst_26 = arith.constant dense<0.000000e+00> : vector<16x128xf32>
    %29 = tpu.matmul %28, %0, %cst_26 {dimension_numbers = #tpu.dot_dimension_numbers<[1], [0], [0], [1], [0, 0, 1, 1], [], []>} : vector<16x128xf32>, vector<128x128xf32>, vector<16x128xf32> -> vector<16x128xf32>
    %30 = vector.shape_cast %29 : vector<16x128xf32> to vector<16x1x128xf32>
    %c1_i32_27 = arith.constant 1 : i32
    %31 = arith.addi %c2_i32, %c1_i32_27 : i32
    %c0_28 = arith.constant 0 : index
    %32 = arith.index_cast %31 : i32 to index
    %c0_29 = arith.constant 0 : index
    %33 = vector.load %arg5[%c0_28, %32, %c0_29] : memref<16x8x128xf32, #tpu.memory_space<vmem>>, vector<16x1x128xf32>
    tpu.vector_store %arg5[%c0_28, %32, %c0_29], %30 {strides = array<i32>} : memref<16x8x128xf32, #tpu.memory_space<vmem>>, vector<16x1x128xf32>,
    %c3_i32 = arith.constant 3 : i32
    %34 = arith.index_cast %c3_i32 : i32 to index
    %c0_30 = arith.constant 0 : index
    %c0_31 = arith.constant 0 : index
    %35 = vector.load %arg4[%34, %c0_30, %c0_31] : memref<7x128x128xf32, #tpu.memory_space<vmem>>, vector<1x128x128xf32>
    %36 = vector.shape_cast %35 : vector<1x128x128xf32> to vector<128x128xf32>
    %cst_32 = arith.constant dense<0.000000e+00> : vector<16x128xf32>
    %37 = tpu.matmul %28, %36, %cst_32 {dimension_numbers = #tpu.dot_dimension_numbers<[1], [0], [0], [1], [0, 0, 1, 1], [], []>} : vector<16x128xf32>, vector<128x128xf32>, vector<16x128xf32> -> vector<16x128xf32>
    %cst_33 = arith.constant dense<0.000000e+00> : vector<16x128xf32>
    %38 = tpu.matmul %37, %0, %cst_33 {dimension_numbers = #tpu.dot_dimension_numbers<[1], [0], [0], [1], [0, 0, 1, 1], [], []>} : vector<16x128xf32>, vector<128x128xf32>, vector<16x128xf32> -> vector<16x128xf32>
    %39 = vector.shape_cast %38 : vector<16x128xf32> to vector<16x1x128xf32>
    %c1_i32_34 = arith.constant 1 : i32
    %40 = arith.addi %c3_i32, %c1_i32_34 : i32
    %c0_35 = arith.constant 0 : index
    %41 = arith.index_cast %40 : i32 to index
    %c0_36 = arith.constant 0 : index
    %42 = vector.load %arg5[%c0_35, %41, %c0_36] : memref<16x8x128xf32, #tpu.memory_space<vmem>>, vector<16x1x128xf32>
    tpu.vector_store %arg5[%c0_35, %41, %c0_36], %39 {strides = array<i32>} : memref<16x8x128xf32, #tpu.memory_space<vmem>>, vector<16x1x128xf32>,
    %c4_i32 = arith.constant 4 : i32
    %43 = arith.index_cast %c4_i32 : i32 to index
    %c0_37 = arith.constant 0 : index
    %c0_38 = arith.constant 0 : index
    %44 = vector.load %arg4[%43, %c0_37, %c0_38] : memref<7x128x128xf32, #tpu.memory_space<vmem>>, vector<1x128x128xf32>
    %45 = vector.shape_cast %44 : vector<1x128x128xf32> to vector<128x128xf32>
    %cst_39 = arith.constant dense<0.000000e+00> : vector<16x128xf32>
    %46 = tpu.matmul %37, %45, %cst_39 {dimension_numbers = #tpu.dot_dimension_numbers<[1], [0], [0], [1], [0, 0, 1, 1], [], []>} : vector<16x128xf32>, vector<128x128xf32>, vector<16x128xf32> -> vector<16x128xf32>
    %cst_40 = arith.constant dense<0.000000e+00> : vector<16x128xf32>
    %47 = tpu.matmul %46, %0, %cst_40 {dimension_numbers = #tpu.dot_dimension_numbers<[1], [0], [0], [1], [0, 0, 1, 1], [], []>} : vector<16x128xf32>, vector<128x128xf32>, vector<16x128xf32> -> vector<16x128xf32>
    %48 = vector.shape_cast %47 : vector<16x128xf32> to vector<16x1x128xf32>
    %c1_i32_41 = arith.constant 1 : i32
    %49 = arith.addi %c4_i32, %c1_i32_41 : i32
    %c0_42 = arith.constant 0 : index
    %50 = arith.index_cast %49 : i32 to index
    %c0_43 = arith.constant 0 : index
    %51 = vector.load %arg5[%c0_42, %50, %c0_43] : memref<16x8x128xf32, #tpu.memory_space<vmem>>, vector<16x1x128xf32>
    tpu.vector_store %arg5[%c0_42, %50, %c0_43], %48 {strides = array<i32>} : memref<16x8x128xf32, #tpu.memory_space<vmem>>, vector<16x1x128xf32>,
    %c5_i32 = arith.constant 5 : i32
    %52 = arith.index_cast %c5_i32 : i32 to index
    %c0_44 = arith.constant 0 : index
    %c0_45 = arith.constant 0 : index
    %53 = vector.load %arg4[%52, %c0_44, %c0_45] : memref<7x128x128xf32, #tpu.memory_space<vmem>>, vector<1x128x128xf32>
    %54 = vector.shape_cast %53 : vector<1x128x128xf32> to vector<128x128xf32>
    %cst_46 = arith.constant dense<0.000000e+00> : vector<16x128xf32>
    %55 = tpu.matmul %46, %54, %cst_46 {dimension_numbers = #tpu.dot_dimension_numbers<[1], [0], [0], [1], [0, 0, 1, 1], [], []>} : vector<16x128xf32>, vector<128x128xf32>, vector<16x128xf32> -> vector<16x128xf32>
    %cst_47 = arith.constant dense<0.000000e+00> : vector<16x128xf32>
    %56 = tpu.matmul %55, %0, %cst_47 {dimension_numbers = #tpu.dot_dimension_numbers<[1], [0], [0], [1], [0, 0, 1, 1], [], []>} : vector<16x128xf32>, vector<128x128xf32>, vector<16x128xf32> -> vector<16x128xf32>
    %57 = vector.shape_cast %56 : vector<16x128xf32> to vector<16x1x128xf32>
    %c1_i32_48 = arith.constant 1 : i32
    %58 = arith.addi %c5_i32, %c1_i32_48 : i32
    %c0_49 = arith.constant 0 : index
    %59 = arith.index_cast %58 : i32 to index
    %c0_50 = arith.constant 0 : index
    %60 = vector.load %arg5[%c0_49, %59, %c0_50] : memref<16x8x128xf32, #tpu.memory_space<vmem>>, vector<16x1x128xf32>
    tpu.vector_store %arg5[%c0_49, %59, %c0_50], %57 {strides = array<i32>} : memref<16x8x128xf32, #tpu.memory_space<vmem>>, vector<16x1x128xf32>,
    %c6_i32 = arith.constant 6 : i32
    %61 = arith.index_cast %c6_i32 : i32 to index
    %c0_51 = arith.constant 0 : index
    %c0_52 = arith.constant 0 : index
    %62 = vector.load %arg4[%61, %c0_51, %c0_52] : memref<7x128x128xf32, #tpu.memory_space<vmem>>, vector<1x128x128xf32>
    %63 = vector.shape_cast %62 : vector<1x128x128xf32> to vector<128x128xf32>
    %cst_53 = arith.constant dense<0.000000e+00> : vector<16x128xf32>
    %64 = tpu.matmul %55, %63, %cst_53 {dimension_numbers = #tpu.dot_dimension_numbers<[1], [0], [0], [1], [0, 0, 1, 1], [], []>} : vector<16x128xf32>, vector<128x128xf32>, vector<16x128xf32> -> vector<16x128xf32>
    %cst_54 = arith.constant dense<0.000000e+00> : vector<16x128xf32>
    %65 = tpu.matmul %64, %0, %cst_54 {dimension_numbers = #tpu.dot_dimension_numbers<[1], [0], [0], [1], [0, 0, 1, 1], [], []>} : vector<16x128xf32>, vector<128x128xf32>, vector<16x128xf32> -> vector<16x128xf32>
    %66 = vector.shape_cast %65 : vector<16x128xf32> to vector<16x1x128xf32>
    %c1_i32_55 = arith.constant 1 : i32
    %67 = arith.addi %c6_i32, %c1_i32_55 : i32
    %c0_56 = arith.constant 0 : index
    %68 = arith.index_cast %67 : i32 to index
    %c0_57 = arith.constant 0 : index
    %69 = vector.load %arg5[%c0_56, %68, %c0_57] : memref<16x8x128xf32, #tpu.memory_space<vmem>>, vector<16x1x128xf32>
    tpu.vector_store %arg5[%c0_56, %68, %c0_57], %66 {strides = array<i32>} : memref<16x8x128xf32, #tpu.memory_space<vmem>>, vector<16x1x128xf32>,
    %c7_i32 = arith.constant 7 : i32
    return
  }
  func.func @transform_0(%arg0: i32) -> (i32, i32) {
    %c0_i32 = arith.constant 0 : i32
    %c0_i32_0 = arith.constant 0 : i32
    return %arg0, %c0_i32 : i32, i32
  }
  func.func @transform_1(%arg0: i32) -> (i32, i32) {
    %c0_i32 = arith.constant 0 : i32
    %c0_i32_0 = arith.constant 0 : i32
    %c0_i32_1 = arith.constant 0 : i32
    return %c0_i32, %c0_i32_0 : i32, i32
  }
  func.func @transform_2(%arg0: i32) -> (i32, i32) {
    %c0_i32 = arith.constant 0 : i32
    %c0_i32_0 = arith.constant 0 : i32
    %c0_i32_1 = arith.constant 0 : i32
    return %c0_i32, %c0_i32_0 : i32, i32
  }
  func.func @transform_3(%arg0: i32) -> (i32, i32, i32) {
    %c0_i32 = arith.constant 0 : i32
    %c0_i32_0 = arith.constant 0 : i32
    %c0_i32_1 = arith.constant 0 : i32
    %c0_i32_2 = arith.constant 0 : i32
    return %c0_i32, %c0_i32_0, %c0_i32_1 : i32, i32, i32
  }
  func.func @transform_4(%arg0: i32) -> (i32, i32, i32) {
    %c0_i32 = arith.constant 0 : i32
    %c0_i32_0 = arith.constant 0 : i32
    %c0_i32_1 = arith.constant 0 : i32
    return %arg0, %c0_i32, %c0_i32_0 : i32, i32, i32
  }
}

</mosaic_0001>

<llo_original>
// kernel: tpu_custom_call.1
$region0: #{tpu_custom_call.1}
  #allocation0 [shape = 'u32[]', space=smem, size = 0x4, offset = 0x4, fixed_abs, tag = 'smem constant byte address 0x4 - core index']
  #allocation1 [shape = 'u32[144,128]{1,0:T(1,128)}', space=vmem, size = 0x12000, scoped, tag = 'internal scratch']
  %s0 = inlined_call_operand.hbm [shape: f32[16,128], index: 0, kind: input, shape index: {}]
  %s1 = inlined_call_operand.hbm [shape: f32[128,128], index: 1, kind: input, shape index: {}]
  %s2 = inlined_call_operand.hbm [shape: f32[128,128], index: 2, kind: input, shape index: {}]
  %s3 = inlined_call_operand.hbm [shape: f32[7,128,128], index: 3, kind: input, shape index: {}]
  %s4 = inlined_call_operand.hbm [shape: f32[16,8,128], index: 4, kind: output, shape index: {}]
  %s5 = sld [smem:[#allocation0]]
  $region42: #{tpu_custom_call.1} parent=0
    _
  %s7 = ssub.s32 1, %s5
  %s8 = scalar_select 0, %s7, %s5
  $region1: #{tpu_custom_call.1} parent=0
    #allocation2 [shape = 'u8[8192]{0}', space=vmem, size = 0x2000, scoped, tag = 'input window, operand 0, single buffered']
    #allocation3 [shape = 's32[1]{0}', space=sflag, size = 0x4, scoped, tag = 'scoped memory for tpu_custom_call.1']
    #allocation4 [shape = 's32[1]{0}', space=sflag, size = 0x4, scoped, tag = 'scoped memory for tpu_custom_call.1']
    #allocation5 [shape = 'u8[65536]{0}', space=vmem, size = 0x10000, scoped, tag = 'input window, operand 1, single buffered']
    #allocation6 [shape = 's32[1]{0}', space=sflag, size = 0x4, scoped, tag = 'scoped memory for tpu_custom_call.1']
    #allocation7 [shape = 'u8[65536]{0}', space=vmem, size = 0x10000, scoped, tag = 'input window, operand 2, single buffered']
    #allocation8 [shape = 'u8[458752]{0}', space=vmem, size = 0x70000, scoped, tag = 'input window, operand 3, single buffered']
    #allocation9 [shape = 's32[1]{0}', space=sflag, size = 0x4, scoped, tag = 'scoped memory for tpu_custom_call.1']
    #allocation10 [shape = 'u8[65536]{0}', space=vmem, size = 0x10000, scoped, tag = 'output window, operand 0, single buffered']
    %9 = vsyncpa [#allocation3], 0
    %10 = vsyncpa [#allocation6], 0
    %11 = vsyncpa [#allocation9], 0
    %12 = vsyncpa [#allocation4], 0
    // Predicated region
    $region2: #{tpu_custom_call.1} parent=1 // pred_check
      _
    $region3: #{tpu_custom_call.1} parent=1 // pred_check_branch
      %14 = sbr.rel (0) target = $region5
    $region4: #{tpu_custom_call.1} parent=1 // pred_region
      %s16 = ssub.s32 256, 256
      %17 = vsyncadd [#allocation3], %s16
      %s18 = sshll.u32 [#allocation2], 4
      %s19 = int_to_ptr.vmem [resolvable:$true] %s18
      %24 = dma.hbm_to_vmem [thread:$0]  %s0, 256, %s19, [#allocation3], 128, 128, 8
    $region5: #{tpu_custom_call.1} parent=1 // pred_fallthru
      _
    // Predicated region
    $region6: #{tpu_custom_call.1} parent=1 // pred_check
      _
    $region7: #{tpu_custom_call.1} parent=1 // pred_check_branch
      %26 = sbr.rel (0) target = $region9
    $region8: #{tpu_custom_call.1} parent=1 // pred_region
      %s28 = ssub.s32 2048, 2048
      %29 = vsyncadd [#allocation6], %s28
      %s30 = sshll.u32 [#allocation5], 4
      %s31 = int_to_ptr.vmem [resolvable:$true] %s30
      %36 = dma.hbm_to_vmem [thread:$0]  %s1, 2048, %s31, [#allocation6], 128, 128, 8
    $region9: #{tpu_custom_call.1} parent=1 // pred_fallthru
      _
    // Predicated region
    $region10: #{tpu_custom_call.1} parent=1 // pred_check
      _
    $region11: #{tpu_custom_call.1} parent=1 // pred_check_branch
      %38 = sbr.rel (0) target = $region13
    $region12: #{tpu_custom_call.1} parent=1 // pred_region
      %s40 = ssub.s32 2048, 2048
      %41 = vsyncadd [#allocation6], %s40
      %s42 = sshll.u32 [#allocation7], 4
      %s43 = int_to_ptr.vmem [resolvable:$true] %s42
      %48 = dma.hbm_to_vmem [thread:$0]  %s2, 2048, %s43, [#allocation6], 128, 128, 8
    $region13: #{tpu_custom_call.1} parent=1 // pred_fallthru
      _
    // Predicated region
    $region14: #{tpu_custom_call.1} parent=1 // pred_check
      _
    $region15: #{tpu_custom_call.1} parent=1 // pred_check_branch
      %50 = sbr.rel (0) target = $region17
    $region16: #{tpu_custom_call.1} parent=1 // pred_region
      %s52 = ssub.s32 14336, 14336
      %53 = vsyncadd [#allocation9], %s52
      %s54 = sshll.u32 [#allocation8], 4
      %s55 = int_to_ptr.vmem [resolvable:$true] %s54
      %60 = dma.hbm_to_vmem [thread:$0]  %s3, 14336, %s55, [#allocation9], 128, 128, 8
    $region17: #{tpu_custom_call.1} parent=1 // pred_fallthru
      _
    // Predicated region
    $region18: #{tpu_custom_call.1} parent=1 // pred_check
      _
    $region19: #{tpu_custom_call.1} parent=1 // pred_check_branch
      %62 = sbr.rel (0) target = $region21
    $region20: #{tpu_custom_call.1} parent=1 // pred_region
      %63 = dma.done [#allocation3], 256
    $region21: #{tpu_custom_call.1} parent=1 // pred_fallthru
      _
    // Predicated region
    $region22: #{tpu_custom_call.1} parent=1 // pred_check
      _
    $region23: #{tpu_custom_call.1} parent=1 // pred_check_branch
      %65 = sbr.rel (0) target = $region25
    $region24: #{tpu_custom_call.1} parent=1 // pred_region
      %66 = dma.done [#allocation6], 2048
    $region25: #{tpu_custom_call.1} parent=1 // pred_fallthru
      _
    // Predicated region
    $region26: #{tpu_custom_call.1} parent=1 // pred_check
      _
    $region27: #{tpu_custom_call.1} parent=1 // pred_check_branch
      %68 = sbr.rel (0) target = $region29
    $region28: #{tpu_custom_call.1} parent=1 // pred_region
      %69 = dma.done [#allocation6], 2048
    $region29: #{tpu_custom_call.1} parent=1 // pred_fallthru
      _
    // Predicated region
    $region30: #{tpu_custom_call.1} parent=1 // pred_check
      _
    $region31: #{tpu_custom_call.1} parent=1 // pred_check_branch
      %71 = sbr.rel (0) target = $region33
    $region32: #{tpu_custom_call.1} parent=1 // pred_region
      %72 = dma.done [#allocation9], 14336
    $region33: #{tpu_custom_call.1} parent=1 // pred_fallthru
      _
    %v73 = vld [vmem:[#allocation7] sm:$0xff]
    %v74 = vld [vmem:[#allocation7 + $0x8] sm:$0xff]
    %v75 = vld [vmem:[#allocation7 + $0x10] sm:$0xff]
    %v76 = vld [vmem:[#allocation7 + $0x18] sm:$0xff]
    %v77 = vld [vmem:[#allocation7 + $0x20] sm:$0xff]
    %v78 = vld [vmem:[#allocation7 + $0x28] sm:$0xff]
    %v79 = vld [vmem:[#allocation7 + $0x30] sm:$0xff]
    %v80 = vld [vmem:[#allocation7 + $0x38] sm:$0xff]
    %v81 = vld [vmem:[#allocation7 + $0x40] sm:$0xff]
    %v82 = vld [vmem:[#allocation7 + $0x48] sm:$0xff]
    %v83 = vld [vmem:[#allocation7 + $0x50] sm:$0xff]
    %v84 = vld [vmem:[#allocation7 + $0x58] sm:$0xff]
    %v85 = vld [vmem:[#allocation7 + $0x60] sm:$0xff]
    %v86 = vld [vmem:[#allocation7 + $0x68] sm:$0xff]
    %v87 = vld [vmem:[#allocation7 + $0x70] sm:$0xff]
    %v88 = vld [vmem:[#allocation7 + $0x78] sm:$0xff]
    %v89 = vld [vmem:[#allocation2] sm:$0xff]
    %v90 = vld [vmem:[#allocation2 + $0x8] sm:$0xff]
    %v91 = vld [vmem:[#allocation5] sm:$0xff]
    %v92 = vld [vmem:[#allocation5 + $0x8] sm:$0xff]
    %v93 = vld [vmem:[#allocation5 + $0x10] sm:$0xff]
    %v94 = vld [vmem:[#allocation5 + $0x18] sm:$0xff]
    %v95 = vld [vmem:[#allocation5 + $0x20] sm:$0xff]
    %v96 = vld [vmem:[#allocation5 + $0x28] sm:$0xff]
    %v97 = vld [vmem:[#allocation5 + $0x30] sm:$0xff]
    %v98 = vld [vmem:[#allocation5 + $0x38] sm:$0xff]
    %v99 = vld [vmem:[#allocation5 + $0x40] sm:$0xff]
    %v100 = vld [vmem:[#allocation5 + $0x48] sm:$0xff]
    %v101 = vld [vmem:[#allocation5 + $0x50] sm:$0xff]
    %v102 = vld [vmem:[#allocation5 + $0x58] sm:$0xff]
    %v103 = vld [vmem:[#allocation5 + $0x60] sm:$0xff]
    %v104 = vld [vmem:[#allocation5 + $0x68] sm:$0xff]
    %v105 = vld [vmem:[#allocation5 + $0x70] sm:$0xff]
    %v106 = vld [vmem:[#allocation5 + $0x78] sm:$0xff]
    %107 = vmatprep.subr.mxu0 0.0
    %108 = vmatpush1.msra.mxu0 %v91
    %109 = vmatprep.subr.mxu0 0.0
    %110 = vmatpush1.msra.mxu0 %v92
    %111 = vmatprep.subr.mxu0 0.0
    %112 = vmatpush1.msra.mxu0 %v93
    %113 = vmatprep.subr.mxu0 0.0
    %114 = vmatpush1.msra.mxu0 %v94
    %115 = vmatprep.subr.mxu0 0.0
    %116 = vmatpush1.msra.mxu0 %v95
    %117 = vmatprep.subr.mxu0 0.0
    %118 = vmatpush1.msra.mxu0 %v96
    %119 = vmatprep.subr.mxu0 0.0
    %120 = vmatpush1.msra.mxu0 %v97
    %121 = vmatprep.subr.mxu0 0.0
    %122 = vmatpush1.msra.mxu0 %v98
    %123 = vmatprep.subr.mxu0 0.0
    %124 = vmatpush1.msra.mxu0 %v99
    %125 = vmatprep.subr.mxu0 0.0
    %126 = vmatpush1.msra.mxu0 %v100
    %127 = vmatprep.subr.mxu0 0.0
    %128 = vmatpush1.msra.mxu0 %v101
    %129 = vmatprep.subr.mxu0 0.0
    %130 = vmatpush1.msra.mxu0 %v102
    %131 = vmatprep.subr.mxu0 0.0
    %132 = vmatpush1.msra.mxu0 %v103
    %133 = vmatprep.subr.mxu0 0.0
    %134 = vmatpush1.msra.mxu0 %v104
    %135 = vmatprep.subr.mxu0 0.0
    %136 = vmatpush1.msra.mxu0 %v105
    %137 = vmatprep.subr.mxu0 0.0
    %138 = vmatpush1.msra.mxu0 %v106
    %139 = vmatprep.subr.mxu0 0.0
    %140 = vmatpush1.msra.mxu0 0.0
    %141 = vmatprep.subr.mxu0 0.0
    %142 = vmatpush1.msra.mxu0 0.0
    %143 = vmatprep.subr.mxu0 0.0
    %144 = vmatpush1.msra.mxu0 0.0
    %145 = vmatprep.subr.mxu0 0.0
    %146 = vmatpush1.msra.mxu0 0.0
    %147 = vmatprep.subr.mxu0 0.0
    %148 = vmatpush1.msra.mxu0 0.0
    %149 = vmatprep.subr.mxu0 0.0
    %150 = vmatpush1.msra.mxu0 0.0
    %151 = vmatprep.subr.mxu0 0.0
    %152 = vmatpush1.msra.mxu0 0.0
    %153 = vmatprep.subr.mxu0 0.0
    %154 = vmatpush1.msra.mxu0 0.0
    %155 = vmatprep.subr.mxu0 0.0
    %156 = vmatpush1.msra.mxu0 0.0
    %157 = vmatprep.subr.mxu0 0.0
    %158 = vmatpush1.msra.mxu0 0.0
    %159 = vmatprep.subr.mxu0 0.0
    %160 = vmatpush1.msra.mxu0 0.0
    %161 = vmatprep.subr.mxu0 0.0
    %162 = vmatpush1.msra.mxu0 0.0
    %163 = vmatprep.subr.mxu0 0.0
    %164 = vmatpush1.msra.mxu0 0.0
    %165 = vmatprep.subr.mxu0 0.0
    %166 = vmatpush1.msra.mxu0 0.0
    %167 = vmatprep.subr.mxu0 0.0
    %168 = vmatpush1.msra.mxu0 0.0
    %169 = vmatprep.subr.mxu0 0.0
    %170 = vmatpush1.msra.mxu0 0.0
    %171 = vmatprep.mubr.f32.mxu0 0.0
    %172 = vmatmul.mubr.f32.gmra.mrb[0].mxu0 %v89
    %v173 = vpop.f32.mrb[0].mxu0
    %v174 = vadd.f32 0.0, %v173
    %v175 = vpop.f32.mrb[0].mxu0
    %176 = vmatprep.mubr.f32.mxu0 0.0
    %177 = vmatmul.mubr.f32.gmra.mrb[0].mxu0 %v90
    %v178 = vpop.f32.mrb[0].mxu0
    %v179 = vadd.f32 0.0, %v178
    %v180 = vpop.f32.mrb[0].mxu0
    %181 = vdwg.mxu0
    %182 = vmatprep.subr.mxu0 0.0
    %183 = vmatpush1.msra.mxu0 %v73
    %184 = vmatprep.subr.mxu0 0.0
    %185 = vmatpush1.msra.mxu0 %v74
    %186 = vmatprep.subr.mxu0 0.0
    %187 = vmatpush1.msra.mxu0 %v75
    %188 = vmatprep.subr.mxu0 0.0
    %189 = vmatpush1.msra.mxu0 %v76
    %190 = vmatprep.subr.mxu0 0.0
    %191 = vmatpush1.msra.mxu0 %v77
    %192 = vmatprep.subr.mxu0 0.0
    %193 = vmatpush1.msra.mxu0 %v78
    %194 = vmatprep.subr.mxu0 0.0
    %195 = vmatpush1.msra.mxu0 %v79
    %196 = vmatprep.subr.mxu0 0.0
    %197 = vmatpush1.msra.mxu0 %v80
    %198 = vmatprep.subr.mxu0 0.0
    %199 = vmatpush1.msra.mxu0 %v81
    %200 = vmatprep.subr.mxu0 0.0
    %201 = vmatpush1.msra.mxu0 %v82
    %202 = vmatprep.subr.mxu0 0.0
    %203 = vmatpush1.msra.mxu0 %v83
    %204 = vmatprep.subr.mxu0 0.0
    %205 = vmatpush1.msra.mxu0 %v84
    %206 = vmatprep.subr.mxu0 0.0
    %207 = vmatpush1.msra.mxu0 %v85
    %208 = vmatprep.subr.mxu0 0.0
    %209 = vmatpush1.msra.mxu0 %v86
    %210 = vmatprep.subr.mxu0 0.0
    %211 = vmatpush1.msra.mxu0 %v87
    %212 = vmatprep.subr.mxu0 0.0
    %213 = vmatpush1.msra.mxu0 %v88
    %214 = vmatprep.subr.mxu0 0.0
    %215 = vmatpush1.msra.mxu0 0.0
    %216 = vmatprep.subr.mxu0 0.0
    %217 = vmatpush1.msra.mxu0 0.0
    %218 = vmatprep.subr.mxu0 0.0
    %219 = vmatpush1.msra.mxu0 0.0
    %220 = vmatprep.subr.mxu0 0.0
    %221 = vmatpush1.msra.mxu0 0.0
    %222 = vmatprep.subr.mxu0 0.0
    %223 = vmatpush1.msra.mxu0 0.0
    %224 = vmatprep.subr.mxu0 0.0
    %225 = vmatpush1.msra.mxu0 0.0
    %226 = vmatprep.subr.mxu0 0.0
    %227 = vmatpush1.msra.mxu0 0.0
    %228 = vmatprep.subr.mxu0 0.0
    %229 = vmatpush1.msra.mxu0 0.0
    %230 = vmatprep.subr.mxu0 0.0
    %231 = vmatpush1.msra.mxu0 0.0
    %232 = vmatprep.subr.mxu0 0.0
    %233 = vmatpush1.msra.mxu0 0.0
    %234 = vmatprep.subr.mxu0 0.0
    %235 = vmatpush1.msra.mxu0 0.0
    %236 = vmatprep.subr.mxu0 0.0
    %237 = vmatpush1.msra.mxu0 0.0
    %238 = vmatprep.subr.mxu0 0.0
    %239 = vmatpush1.msra.mxu0 0.0
    %240 = vmatprep.subr.mxu0 0.0
    %241 = vmatpush1.msra.mxu0 0.0
    %242 = vmatprep.subr.mxu0 0.0
    %243 = vmatpush1.msra.mxu0 0.0
    %244 = vmatprep.subr.mxu0 0.0
    %245 = vmatpush1.msra.mxu0 0.0
    %246 = vmatprep.mubr.f32.mxu0 0.0
    %247 = vmatmul.mubr.f32.gmra.mrb[0].mxu0 %v174
    %v248 = vpop.f32.mrb[0].mxu0
    %v249 = vadd.f32 0.0, %v248
    %v250 = vpop.f32.mrb[0].mxu0
    %251 = vmatprep.mubr.f32.mxu0 0.0
    %252 = vmatmul.mubr.f32.gmra.mrb[0].mxu0 %v179
    %v253 = vpop.f32.mrb[0].mxu0
    %v254 = vadd.f32 0.0, %v253
    %v255 = vpop.f32.mrb[0].mxu0
    %256 = vdwg.mxu0
    %v259 = vcombine.high %v249, %v249
    %v261 = vunpack.c.l.s4 1966171168
    %v262 = vunpack.c.0.s8 %v261
    %v263 = vlaneseq
    %v264 = vshrl.u32 %v263, 7
    %v265 = vsub.s32 %v262, %v264
    %v266 = vrot.slane %v249, %v265
    %v268 = vunpack.c.l.s4 1966171168
    %v269 = vunpack.c.0.s8 %v268
    %v270 = vlaneseq
    %v271 = vshrl.u32 %v270, 7
    %v272 = vsub.s32 %v269, %v271
    %v273 = vrot.slane %v259, %v272
    %v274 = vcombine.high %v266, %v266
    %v275 = vcombine.high %v273, %v273
    %v277 = vunpack.c.l.s4 1966171168
    %v278 = vunpack.c.0.s8 %v277
    %v279 = vlaneseq
    %v280 = vshrl.u32 %v279, 7
    %v281 = vsub.s32 %v278, %v280
    %v282 = vrot.slane %v266, %v281
    %v284 = vunpack.c.l.s4 1966171168
    %v285 = vunpack.c.0.s8 %v284
    %v286 = vlaneseq
    %v287 = vshrl.u32 %v286, 7
    %v288 = vsub.s32 %v285, %v287
    %v289 = vrot.slane %v273, %v288
    %v291 = vunpack.c.l.s4 1966171168
    %v292 = vunpack.c.0.s8 %v291
    %v293 = vlaneseq
    %v294 = vshrl.u32 %v293, 7
    %v295 = vsub.s32 %v292, %v294
    %v296 = vrot.slane %v274, %v295
    %v298 = vunpack.c.l.s4 1966171168
    %v299 = vunpack.c.0.s8 %v298
    %v300 = vlaneseq
    %v301 = vshrl.u32 %v300, 7
    %v302 = vsub.s32 %v299, %v301
    %v303 = vrot.slane %v275, %v302
    %v304 = vcombine.high %v282, %v282
    %v305 = vcombine.high %v289, %v289
    %v306 = vcombine.high %v296, %v296
    %v307 = vcombine.high %v303, %v303
    %v308 = vcombine.high %v254, %v254
    %v310 = vunpack.c.l.s4 1966171168
    %v311 = vunpack.c.0.s8 %v310
    %v312 = vlaneseq
    %v313 = vshrl.u32 %v312, 7
    %v314 = vsub.s32 %v311, %v313
    %v315 = vrot.slane %v254, %v314
    %v317 = vunpack.c.l.s4 1966171168
    %v318 = vunpack.c.0.s8 %v317
    %v319 = vlaneseq
    %v320 = vshrl.u32 %v319, 7
    %v321 = vsub.s32 %v318, %v320
    %v322 = vrot.slane %v308, %v321
    %v323 = vcombine.high %v315, %v315
    %v324 = vcombine.high %v322, %v322
    %v326 = vunpack.c.l.s4 1966171168
    %v327 = vunpack.c.0.s8 %v326
    %v328 = vlaneseq
    %v329 = vshrl.u32 %v328, 7
    %v330 = vsub.s32 %v327, %v329
    %v331 = vrot.slane %v315, %v330
    %v333 = vunpack.c.l.s4 1966171168
    %v334 = vunpack.c.0.s8 %v333
    %v335 = vlaneseq
    %v336 = vshrl.u32 %v335, 7
    %v337 = vsub.s32 %v334, %v336
    %v338 = vrot.slane %v322, %v337
    %v340 = vunpack.c.l.s4 1966171168
    %v341 = vunpack.c.0.s8 %v340
    %v342 = vlaneseq
    %v343 = vshrl.u32 %v342, 7
    %v344 = vsub.s32 %v341, %v343
    %v345 = vrot.slane %v323, %v344
    %v347 = vunpack.c.l.s4 1966171168
    %v348 = vunpack.c.0.s8 %v347
    %v349 = vlaneseq
    %v350 = vshrl.u32 %v349, 7
    %v351 = vsub.s32 %v348, %v350
    %v352 = vrot.slane %v324, %v351
    %v353 = vcombine.high %v331, %v331
    %v354 = vcombine.high %v338, %v338
    %v355 = vcombine.high %v345, %v345
    %v356 = vcombine.high %v352, %v352
    %373 = vst [vmem:[#allocation10] sm:$0x1] %v282
    %374 = vst [vmem:[#allocation10 + $0x8] sm:$0x1] %v296
    %375 = vst [vmem:[#allocation10 + $0x10] sm:$0x1] %v304
    %376 = vst [vmem:[#allocation10 + $0x18] sm:$0x1] %v306
    %377 = vst [vmem:[#allocation10 + $0x20] sm:$0x1] %v289
    %378 = vst [vmem:[#allocation10 + $0x28] sm:$0x1] %v303
    %379 = vst [vmem:[#allocation10 + $0x30] sm:$0x1] %v305
    %380 = vst [vmem:[#allocation10 + $0x38] sm:$0x1] %v307
    %381 = vst [vmem:[#allocation10 + $0x40] sm:$0x1] %v331
    %382 = vst [vmem:[#allocation10 + $0x48] sm:$0x1] %v345
    %383 = vst [vmem:[#allocation10 + $0x50] sm:$0x1] %v353
    %384 = vst [vmem:[#allocation10 + $0x58] sm:$0x1] %v355
    %385 = vst [vmem:[#allocation10 + $0x60] sm:$0x1] %v338
    %386 = vst [vmem:[#allocation10 + $0x68] sm:$0x1] %v352
    %387 = vst [vmem:[#allocation10 + $0x70] sm:$0x1] %v354
    %388 = vst [vmem:[#allocation10 + $0x78] sm:$0x1] %v356
    %v389 = vld [vmem:[#allocation8] sm:$0xff]
    %v390 = vld [vmem:[#allocation8 + $0x8] sm:$0xff]
    %v391 = vld [vmem:[#allocation8 + $0x10] sm:$0xff]
    %v392 = vld [vmem:[#allocation8 + $0x18] sm:$0xff]
    %v393 = vld [vmem:[#allocation8 + $0x20] sm:$0xff]
    %v394 = vld [vmem:[#allocation8 + $0x28] sm:$0xff]
    %v395 = vld [vmem:[#allocation8 + $0x30] sm:$0xff]
    %v396 = vld [vmem:[#allocation8 + $0x38] sm:$0xff]
    %v397 = vld [vmem:[#allocation8 + $0x40] sm:$0xff]
    %v398 = vld [vmem:[#allocation8 + $0x48] sm:$0xff]
    %v399 = vld [vmem:[#allocation8 + $0x50] sm:$0xff]
    %v400 = vld [vmem:[#allocation8 + $0x58] sm:$0xff]
    %v401 = vld [vmem:[#allocation8 + $0x60] sm:$0xff]
    %v402 = vld [vmem:[#allocation8 + $0x68] sm:$0xff]
    %v403 = vld [vmem:[#allocation8 + $0x70] sm:$0xff]
    %v404 = vld [vmem:[#allocation8 + $0x78] sm:$0xff]
    %405 = vmatprep.subr.mxu0 0.0
    %406 = vmatpush1.msra.mxu0 %v389
    %407 = vmatprep.subr.mxu0 0.0
    %408 = vmatpush1.msra.mxu0 %v390
    %409 = vmatprep.subr.mxu0 0.0
    %410 = vmatpush1.msra.mxu0 %v391
    %411 = vmatprep.subr.mxu0 0.0
    %412 = vmatpush1.msra.mxu0 %v392
    %413 = vmatprep.subr.mxu0 0.0
    %414 = vmatpush1.msra.mxu0 %v393
    %415 = vmatprep.subr.mxu0 0.0
    %416 = vmatpush1.msra.mxu0 %v394
    %417 = vmatprep.subr.mxu0 0.0
    %418 = vmatpush1.msra.mxu0 %v395
    %419 = vmatprep.subr.mxu0 0.0
    %420 = vmatpush1.msra.mxu0 %v396
    %421 = vmatprep.subr.mxu0 0.0
    %422 = vmatpush1.msra.mxu0 %v397
    %423 = vmatprep.subr.mxu0 0.0
    %424 = vmatpush1.msra.mxu0 %v398
    %425 = vmatprep.subr.mxu0 0.0
    %426 = vmatpush1.msra.mxu0 %v399
    %427 = vmatprep.subr.mxu0 0.0
    %428 = vmatpush1.msra.mxu0 %v400
    %429 = vmatprep.subr.mxu0 0.0
    %430 = vmatpush1.msra.mxu0 %v401
    %431 = vmatprep.subr.mxu0 0.0
    %432 = vmatpush1.msra.mxu0 %v402
    %433 = vmatprep.subr.mxu0 0.0
    %434 = vmatpush1.msra.mxu0 %v403
    %435 = vmatprep.subr.mxu0 0.0
    %436 = vmatpush1.msra.mxu0 %v404
    %437 = vmatprep.subr.mxu0 0.0
    %438 = vmatpush1.msra.mxu0 0.0
    %439 = vmatprep.subr.mxu0 0.0
    %440 = vmatpush1.msra.mxu0 0.0
    %441 = vmatprep.subr.mxu0 0.0
    %442 = vmatpush1.msra.mxu0 0.0
    %443 = vmatprep.subr.mxu0 0.0
    %444 = vmatpush1.msra.mxu0 0.0
    %445 = vmatprep.subr.mxu0 0.0
    %446 = vmatpush1.msra.mxu0 0.0
    %447 = vmatprep.subr.mxu0 0.0
    %448 = vmatpush1.msra.mxu0 0.0
    %449 = vmatprep.subr.mxu0 0.0
    %450 = vmatpush1.msra.mxu0 0.0
    %451 = vmatprep.subr.mxu0 0.0
    %452 = vmatpush1.msra.mxu0 0.0
    %453 = vmatprep.subr.mxu0 0.0
    %454 = vmatpush1.msra.mxu0 0.0
    %455 = vmatprep.subr.mxu0 0.0
    %456 = vmatpush1.msra.mxu0 0.0
    %457 = vmatprep.subr.mxu0 0.0
    %458 = vmatpush1.msra.mxu0 0.0
    %459 = vmatprep.subr.mxu0 0.0
    %460 = vmatpush1.msra.mxu0 0.0
    %461 = vmatprep.subr.mxu0 0.0
    %462 = vmatpush1.msra.mxu0 0.0
    %463 = vmatprep.subr.mxu0 0.0
    %464 = vmatpush1.msra.mxu0 0.0
    %465 = vmatprep.subr.mxu0 0.0
    %466 = vmatpush1.msra.mxu0 0.0
    %467 = vmatprep.subr.mxu0 0.0
    %468 = vmatpush1.msra.mxu0 0.0
    %469 = vmatprep.mubr.f32.mxu0 0.0
    %470 = vmatmul.mubr.f32.gmra.mrb[0].mxu0 %v174
    %v471 = vpop.f32.mrb[0].mxu0
    %v472 = vadd.f32 0.0, %v471
    %v473 = vpop.f32.mrb[0].mxu0
    %474 = vmatprep.mubr.f32.mxu0 0.0
    %475 = vmatmul.mubr.f32.gmra.mrb[0].mxu0 %v179
    %v476 = vpop.f32.mrb[0].mxu0
    %v477 = vadd.f32 0.0, %v476
    %v478 = vpop.f32.mrb[0].mxu0
    %479 = vdwg.mxu0
    %480 = vmatprep.subr.mxu0 0.0
    %481 = vmatpush1.msra.mxu0 %v73
    %482 = vmatprep.subr.mxu0 0.0
    %483 = vmatpush1.msra.mxu0 %v74
    %484 = vmatprep.subr.mxu0 0.0
    %485 = vmatpush1.msra.mxu0 %v75
    %486 = vmatprep.subr.mxu0 0.0
    %487 = vmatpush1.msra.mxu0 %v76
    %488 = vmatprep.subr.mxu0 0.0
    %489 = vmatpush1.msra.mxu0 %v77
    %490 = vmatprep.subr.mxu0 0.0
    %491 = vmatpush1.msra.mxu0 %v78
    %492 = vmatprep.subr.mxu0 0.0
    %493 = vmatpush1.msra.mxu0 %v79
    %494 = vmatprep.subr.mxu0 0.0
    %495 = vmatpush1.msra.mxu0 %v80
    %496 = vmatprep.subr.mxu0 0.0
    %497 = vmatpush1.msra.mxu0 %v81
    %498 = vmatprep.subr.mxu0 0.0
    %499 = vmatpush1.msra.mxu0 %v82
    %500 = vmatprep.subr.mxu0 0.0
    %501 = vmatpush1.msra.mxu0 %v83
    %502 = vmatprep.subr.mxu0 0.0
    %503 = vmatpush1.msra.mxu0 %v84
    %504 = vmatprep.subr.mxu0 0.0
    %505 = vmatpush1.msra.mxu0 %v85
    %506 = vmatprep.subr.mxu0 0.0
    %507 = vmatpush1.msra.mxu0 %v86
    %508 = vmatprep.subr.mxu0 0.0
    %509 = vmatpush1.msra.mxu0 %v87
    %510 = vmatprep.subr.mxu0 0.0
    %511 = vmatpush1.msra.mxu0 %v88
    %512 = vmatprep.subr.mxu0 0.0
    %513 = vmatpush1.msra.mxu0 0.0
    %514 = vmatprep.subr.mxu0 0.0
    %515 = vmatpush1.msra.mxu0 0.0
    %516 = vmatprep.subr.mxu0 0.0
    %517 = vmatpush1.msra.mxu0 0.0
    %518 = vmatprep.subr.mxu0 0.0
    %519 = vmatpush1.msra.mxu0 0.0
    %520 = vmatprep.subr.mxu0 0.0
    %521 = vmatpush1.msra.mxu0 0.0
    %522 = vmatprep.subr.mxu0 0.0
    %523 = vmatpush1.msra.mxu0 0.0
    %524 = vmatprep.subr.mxu0 0.0
    %525 = vmatpush1.msra.mxu0 0.0
    %526 = vmatprep.subr.mxu0 0.0
    %527 = vmatpush1.msra.mxu0 0.0
    %528 = vmatprep.subr.mxu0 0.0
    %529 = vmatpush1.msra.mxu0 0.0
    %530 = vmatprep.subr.mxu0 0.0
    %531 = vmatpush1.msra.mxu0 0.0
    %532 = vmatprep.subr.mxu0 0.0
    %533 = vmatpush1.msra.mxu0 0.0
    %534 = vmatprep.subr.mxu0 0.0
    %535 = vmatpush1.msra.mxu0 0.0
    %536 = vmatprep.subr.mxu0 0.0
    %537 = vmatpush1.msra.mxu0 0.0
    %538 = vmatprep.subr.mxu0 0.0
    %539 = vmatpush1.msra.mxu0 0.0
    %540 = vmatprep.subr.mxu0 0.0
    %541 = vmatpush1.msra.mxu0 0.0
    %542 = vmatprep.subr.mxu0 0.0
    %543 = vmatpush1.msra.mxu0 0.0
    %544 = vmatprep.mubr.f32.mxu0 0.0
    %545 = vmatmul.mubr.f32.gmra.mrb[0].mxu0 %v472
    %v546 = vpop.f32.mrb[0].mxu0
    %v547 = vadd.f32 0.0, %v546
    %v548 = vpop.f32.mrb[0].mxu0
    %549 = vmatprep.mubr.f32.mxu0 0.0
    %550 = vmatmul.mubr.f32.gmra.mrb[0].mxu0 %v477
    %v551 = vpop.f32.mrb[0].mxu0
    %v552 = vadd.f32 0.0, %v551
    %v553 = vpop.f32.mrb[0].mxu0
    %554 = vdwg.mxu0
    %v557 = vcombine.high %v547, %v547
    %v559 = vunpack.c.l.s4 1966171168
    %v560 = vunpack.c.0.s8 %v559
    %v561 = vlaneseq
    %v562 = vshrl.u32 %v561, 7
    %v563 = vsub.s32 %v560, %v562
    %v564 = vrot.slane %v547, %v563
    %v566 = vunpack.c.l.s4 1966171168
    %v567 = vunpack.c.0.s8 %v566
    %v568 = vlaneseq
    %v569 = vshrl.u32 %v568, 7
    %v570 = vsub.s32 %v567, %v569
    %v571 = vrot.slane %v557, %v570
    %v572 = vcombine.high %v564, %v564
    %v573 = vcombine.high %v571, %v571
    %v575 = vunpack.c.l.s4 1966171168
    %v576 = vunpack.c.0.s8 %v575
    %v577 = vlaneseq
    %v578 = vshrl.u32 %v577, 7
    %v579 = vsub.s32 %v576, %v578
    %v580 = vrot.slane %v564, %v579
    %v582 = vunpack.c.l.s4 1966171168
    %v583 = vunpack.c.0.s8 %v582
    %v584 = vlaneseq
    %v585 = vshrl.u32 %v584, 7
    %v586 = vsub.s32 %v583, %v585
    %v587 = vrot.slane %v571, %v586
    %v589 = vunpack.c.l.s4 1966171168
    %v590 = vunpack.c.0.s8 %v589
    %v591 = vlaneseq
    %v592 = vshrl.u32 %v591, 7
    %v593 = vsub.s32 %v590, %v592
    %v594 = vrot.slane %v572, %v593
    %v596 = vunpack.c.l.s4 1966171168
    %v597 = vunpack.c.0.s8 %v596
    %v598 = vlaneseq
    %v599 = vshrl.u32 %v598, 7
    %v600 = vsub.s32 %v597, %v599
    %v601 = vrot.slane %v573, %v600
    %v602 = vcombine.high %v580, %v580
    %v603 = vcombine.high %v587, %v587
    %v604 = vcombine.high %v594, %v594
    %v605 = vcombine.high %v601, %v601
    %v606 = vcombine.high %v552, %v552
    %v608 = vunpack.c.l.s4 1966171168
    %v609 = vunpack.c.0.s8 %v608
    %v610 = vlaneseq
    %v611 = vshrl.u32 %v610, 7
    %v612 = vsub.s32 %v609, %v611
    %v613 = vrot.slane %v552, %v612
    %v615 = vunpack.c.l.s4 1966171168
    %v616 = vunpack.c.0.s8 %v615
    %v617 = vlaneseq
    %v618 = vshrl.u32 %v617, 7
    %v619 = vsub.s32 %v616, %v618
    %v620 = vrot.slane %v606, %v619
    %v621 = vcombine.high %v613, %v613
    %v622 = vcombine.high %v620, %v620
    %v624 = vunpack.c.l.s4 1966171168
    %v625 = vunpack.c.0.s8 %v624
    %v626 = vlaneseq
    %v627 = vshrl.u32 %v626, 7
    %v628 = vsub.s32 %v625, %v627
    %v629 = vrot.slane %v613, %v628
    %v631 = vunpack.c.l.s4 1966171168
    %v632 = vunpack.c.0.s8 %v631
    %v633 = vlaneseq
    %v634 = vshrl.u32 %v633, 7
    %v635 = vsub.s32 %v632, %v634
    %v636 = vrot.slane %v620, %v635
    %v638 = vunpack.c.l.s4 1966171168
    %v639 = vunpack.c.0.s8 %v638
    %v640 = vlaneseq
    %v641 = vshrl.u32 %v640, 7
    %v642 = vsub.s32 %v639, %v641
    %v643 = vrot.slane %v621, %v642
    %v645 = vunpack.c.l.s4 1966171168
    %v646 = vunpack.c.0.s8 %v645
    %v647 = vlaneseq
    %v648 = vshrl.u32 %v647, 7
    %v649 = vsub.s32 %v646, %v648
    %v650 = vrot.slane %v622, %v649
    %v651 = vcombine.high %v629, %v629
    %v652 = vcombine.high %v636, %v636
    %v653 = vcombine.high %v643, %v643
    %v654 = vcombine.high %v650, %v650
    %671 = vst [vmem:[#allocation10 + $0x1] sm:$0x1] %v580
    %672 = vst [vmem:[#allocation10 + $0x9] sm:$0x1] %v594
    %673 = vst [vmem:[#allocation10 + $0x11] sm:$0x1] %v602
    %674 = vst [vmem:[#allocation10 + $0x19] sm:$0x1] %v604
    %675 = vst [vmem:[#allocation10 + $0x21] sm:$0x1] %v587
    %676 = vst [vmem:[#allocation10 + $0x29] sm:$0x1] %v601
    %677 = vst [vmem:[#allocation10 + $0x31] sm:$0x1] %v603
    %678 = vst [vmem:[#allocation10 + $0x39] sm:$0x1] %v605
    %679 = vst [vmem:[#allocation10 + $0x41] sm:$0x1] %v629
    %680 = vst [vmem:[#allocation10 + $0x49] sm:$0x1] %v643
    %681 = vst [vmem:[#allocation10 + $0x51] sm:$0x1] %v651
    %682 = vst [vmem:[#allocation10 + $0x59] sm:$0x1] %v653
    %683 = vst [vmem:[#allocation10 + $0x61] sm:$0x1] %v636
    %684 = vst [vmem:[#allocation10 + $0x69] sm:$0x1] %v650
    %685 = vst [vmem:[#allocation10 + $0x71] sm:$0x1] %v652
    %686 = vst [vmem:[#allocation10 + $0x79] sm:$0x1] %v654
    %s687 = scalar_lea.vmem [#allocation8], 128
    %v688 = vld [vmem:[%s687] sm:$0xff]
    %v689 = vld [vmem:[%s687 + $0x8] sm:$0xff]
    %v690 = vld [vmem:[%s687 + $0x10] sm:$0xff]
    %v691 = vld [vmem:[%s687 + $0x18] sm:$0xff]
    %v692 = vld [vmem:[%s687 + $0x20] sm:$0xff]
    %v693 = vld [vmem:[%s687 + $0x28] sm:$0xff]
    %v694 = vld [vmem:[%s687 + $0x30] sm:$0xff]
    %v695 = vld [vmem:[%s687 + $0x38] sm:$0xff]
    %v696 = vld [vmem:[%s687 + $0x40] sm:$0xff]
    %v697 = vld [vmem:[%s687 + $0x48] sm:$0xff]
    %v698 = vld [vmem:[%s687 + $0x50] sm:$0xff]
    %v699 = vld [vmem:[%s687 + $0x58] sm:$0xff]
    %v700 = vld [vmem:[%s687 + $0x60] sm:$0xff]
    %v701 = vld [vmem:[%s687 + $0x68] sm:$0xff]
    %v702 = vld [vmem:[%s687 + $0x70] sm:$0xff]
    %v703 = vld [vmem:[%s687 + $0x78] sm:$0xff]
    %704 = vmatprep.subr.mxu0 0.0
    %705 = vmatpush1.msra.mxu0 %v688
    %706 = vmatprep.subr.mxu0 0.0
    %707 = vmatpush1.msra.mxu0 %v689
    %708 = vmatprep.subr.mxu0 0.0
    %709 = vmatpush1.msra.mxu0 %v690
    %710 = vmatprep.subr.mxu0 0.0
    %711 = vmatpush1.msra.mxu0 %v691
    %712 = vmatprep.subr.mxu0 0.0
    %713 = vmatpush1.msra.mxu0 %v692
    %714 = vmatprep.subr.mxu0 0.0
    %715 = vmatpush1.msra.mxu0 %v693
    %716 = vmatprep.subr.mxu0 0.0
    %717 = vmatpush1.msra.mxu0 %v694
    %718 = vmatprep.subr.mxu0 0.0
    %719 = vmatpush1.msra.mxu0 %v695
    %720 = vmatprep.subr.mxu0 0.0
    %721 = vmatpush1.msra.mxu0 %v696
    %722 = vmatprep.subr.mxu0 0.0
    %723 = vmatpush1.msra.mxu0 %v697
    %724 = vmatprep.subr.mxu0 0.0
    %725 = vmatpush1.msra.mxu0 %v698
    %726 = vmatprep.subr.mxu0 0.0
    %727 = vmatpush1.msra.mxu0 %v699
    %728 = vmatprep.subr.mxu0 0.0
    %729 = vmatpush1.msra.mxu0 %v700
    %730 = vmatprep.subr.mxu0 0.0
    %731 = vmatpush1.msra.mxu0 %v701
    %732 = vmatprep.subr.mxu0 0.0
    %733 = vmatpush1.msra.mxu0 %v702
    %734 = vmatprep.subr.mxu0 0.0
    %735 = vmatpush1.msra.mxu0 %v703
    %736 = vmatprep.subr.mxu0 0.0
    %737 = vmatpush1.msra.mxu0 0.0
    %738 = vmatprep.subr.mxu0 0.0
    %739 = vmatpush1.msra.mxu0 0.0
    %740 = vmatprep.subr.mxu0 0.0
    %741 = vmatpush1.msra.mxu0 0.0
    %742 = vmatprep.subr.mxu0 0.0
    %743 = vmatpush1.msra.mxu0 0.0
    %744 = vmatprep.subr.mxu0 0.0
    %745 = vmatpush1.msra.mxu0 0.0
    %746 = vmatprep.subr.mxu0 0.0
    %747 = vmatpush1.msra.mxu0 0.0
    %748 = vmatprep.subr.mxu0 0.0
    %749 = vmatpush1.msra.mxu0 0.0
    %750 = vmatprep.subr.mxu0 0.0
    %751 = vmatpush1.msra.mxu0 0.0
    %752 = vmatprep.subr.mxu0 0.0
    %753 = vmatpush1.msra.mxu0 0.0
    %754 = vmatprep.subr.mxu0 0.0
    %755 = vmatpush1.msra.mxu0 0.0
    %756 = vmatprep.subr.mxu0 0.0
    %757 = vmatpush1.msra.mxu0 0.0
    %758 = vmatprep.subr.mxu0 0.0
    %759 = vmatpush1.msra.mxu0 0.0
    %760 = vmatprep.subr.mxu0 0.0
    %761 = vmatpush1.msra.mxu0 0.0
    %762 = vmatprep.subr.mxu0 0.0
    %763 = vmatpush1.msra.mxu0 0.0
    %764 = vmatprep.subr.mxu0 0.0
    %765 = vmatpush1.msra.mxu0 0.0
    %766 = vmatprep.subr.mxu0 0.0
    %767 = vmatpush1.msra.mxu0 0.0
    %768 = vmatprep.mubr.f32.mxu0 0.0
    %769 = vmatmul.mubr.f32.gmra.mrb[0].mxu0 %v472
    %v770 = vpop.f32.mrb[0].mxu0
    %v771 = vadd.f32 0.0, %v770
    %v772 = vpop.f32.mrb[0].mxu0
    %773 = vmatprep.mubr.f32.mxu0 0.0
    %774 = vmatmul.mubr.f32.gmra.mrb[0].mxu0 %v477
    %v775 = vpop.f32.mrb[0].mxu0
    %v776 = vadd.f32 0.0, %v775
    %v777 = vpop.f32.mrb[0].mxu0
    %778 = vdwg.mxu0
    %779 = vmatprep.subr.mxu0 0.0
    %780 = vmatpush1.msra.mxu0 %v73
    %781 = vmatprep.subr.mxu0 0.0
    %782 = vmatpush1.msra.mxu0 %v74
    %783 = vmatprep.subr.mxu0 0.0
    %784 = vmatpush1.msra.mxu0 %v75
    %785 = vmatprep.subr.mxu0 0.0
    %786 = vmatpush1.msra.mxu0 %v76
    %787 = vmatprep.subr.mxu0 0.0
    %788 = vmatpush1.msra.mxu0 %v77
    %789 = vmatprep.subr.mxu0 0.0
    %790 = vmatpush1.msra.mxu0 %v78
    %791 = vmatprep.subr.mxu0 0.0
    %792 = vmatpush1.msra.mxu0 %v79
    %793 = vmatprep.subr.mxu0 0.0
    %794 = vmatpush1.msra.mxu0 %v80
    %795 = vmatprep.subr.mxu0 0.0
    %796 = vmatpush1.msra.mxu0 %v81
    %797 = vmatprep.subr.mxu0 0.0
    %798 = vmatpush1.msra.mxu0 %v82
    %799 = vmatprep.subr.mxu0 0.0
    %800 = vmatpush1.msra.mxu0 %v83
    %801 = vmatprep.subr.mxu0 0.0
    %802 = vmatpush1.msra.mxu0 %v84
    %803 = vmatprep.subr.mxu0 0.0
    %804 = vmatpush1.msra.mxu0 %v85
    %805 = vmatprep.subr.mxu0 0.0
    %806 = vmatpush1.msra.mxu0 %v86
    %807 = vmatprep.subr.mxu0 0.0
    %808 = vmatpush1.msra.mxu0 %v87
    %809 = vmatprep.subr.mxu0 0.0
    %810 = vmatpush1.msra.mxu0 %v88
    %811 = vmatprep.subr.mxu0 0.0
    %812 = vmatpush1.msra.mxu0 0.0
    %813 = vmatprep.subr.mxu0 0.0
    %814 = vmatpush1.msra.mxu0 0.0
    %815 = vmatprep.subr.mxu0 0.0
    %816 = vmatpush1.msra.mxu0 0.0
    %817 = vmatprep.subr.mxu0 0.0
    %818 = vmatpush1.msra.mxu0 0.0
    %819 = vmatprep.subr.mxu0 0.0
    %820 = vmatpush1.msra.mxu0 0.0
    %821 = vmatprep.subr.mxu0 0.0
    %822 = vmatpush1.msra.mxu0 0.0
    %823 = vmatprep.subr.mxu0 0.0
    %824 = vmatpush1.msra.mxu0 0.0
    %825 = vmatprep.subr.mxu0 0.0
    %826 = vmatpush1.msra.mxu0 0.0
    %827 = vmatprep.subr.mxu0 0.0
    %828 = vmatpush1.msra.mxu0 0.0
    %829 = vmatprep.subr.mxu0 0.0
    %830 = vmatpush1.msra.mxu0 0.0
    %831 = vmatprep.subr.mxu0 0.0
    %832 = vmatpush1.msra.mxu0 0.0
    %833 = vmatprep.subr.mxu0 0.0
    %834 = vmatpush1.msra.mxu0 0.0
    %835 = vmatprep.subr.mxu0 0.0
    %836 = vmatpush1.msra.mxu0 0.0
    %837 = vmatprep.subr.mxu0 0.0
    %838 = vmatpush1.msra.mxu0 0.0
    %839 = vmatprep.subr.mxu0 0.0
    %840 = vmatpush1.msra.mxu0 0.0
    %841 = vmatprep.subr.mxu0 0.0
    %842 = vmatpush1.msra.mxu0 0.0
    %843 = vmatprep.mubr.f32.mxu0 0.0
    %844 = vmatmul.mubr.f32.gmra.mrb[0].mxu0 %v771
    %v845 = vpop.f32.mrb[0].mxu0
    %v846 = vadd.f32 0.0, %v845
    %v847 = vpop.f32.mrb[0].mxu0
    %848 = vmatprep.mubr.f32.mxu0 0.0
    %849 = vmatmul.mubr.f32.gmra.mrb[0].mxu0 %v776
    %v850 = vpop.f32.mrb[0].mxu0
    %v851 = vadd.f32 0.0, %v850
    %v852 = vpop.f32.mrb[0].mxu0
    %853 = vdwg.mxu0
    %v856 = vcombine.high %v846, %v846
    %v858 = vunpack.c.l.s4 1966171168
    %v859 = vunpack.c.0.s8 %v858
    %v860 = vlaneseq
    %v861 = vshrl.u32 %v860, 7
    %v862 = vsub.s32 %v859, %v861
    %v863 = vrot.slane %v846, %v862
    %v865 = vunpack.c.l.s4 1966171168
    %v866 = vunpack.c.0.s8 %v865
    %v867 = vlaneseq
    %v868 = vshrl.u32 %v867, 7
    %v869 = vsub.s32 %v866, %v868
    %v870 = vrot.slane %v856, %v869
    %v871 = vcombine.high %v863, %v863
    %v872 = vcombine.high %v870, %v870
    %v874 = vunpack.c.l.s4 1966171168
    %v875 = vunpack.c.0.s8 %v874
    %v876 = vlaneseq
    %v877 = vshrl.u32 %v876, 7
    %v878 = vsub.s32 %v875, %v877
    %v879 = vrot.slane %v863, %v878
    %v881 = vunpack.c.l.s4 1966171168
    %v882 = vunpack.c.0.s8 %v881
    %v883 = vlaneseq
    %v884 = vshrl.u32 %v883, 7
    %v885 = vsub.s32 %v882, %v884
    %v886 = vrot.slane %v870, %v885
    %v888 = vunpack.c.l.s4 1966171168
    %v889 = vunpack.c.0.s8 %v888
    %v890 = vlaneseq
    %v891 = vshrl.u32 %v890, 7
    %v892 = vsub.s32 %v889, %v891
    %v893 = vrot.slane %v871, %v892
    %v895 = vunpack.c.l.s4 1966171168
    %v896 = vunpack.c.0.s8 %v895
    %v897 = vlaneseq
    %v898 = vshrl.u32 %v897, 7
    %v899 = vsub.s32 %v896, %v898
    %v900 = vrot.slane %v872, %v899
    %v901 = vcombine.high %v879, %v879
    %v902 = vcombine.high %v886, %v886
    %v903 = vcombine.high %v893, %v893
    %v904 = vcombine.high %v900, %v900
    %v905 = vcombine.high %v851, %v851
    %v907 = vunpack.c.l.s4 1966171168
    %v908 = vunpack.c.0.s8 %v907
    %v909 = vlaneseq
    %v910 = vshrl.u32 %v909, 7
    %v911 = vsub.s32 %v908, %v910
    %v912 = vrot.slane %v851, %v911
    %v914 = vunpack.c.l.s4 1966171168
    %v915 = vunpack.c.0.s8 %v914
    %v916 = vlaneseq
    %v917 = vshrl.u32 %v916, 7
    %v918 = vsub.s32 %v915, %v917
    %v919 = vrot.slane %v905, %v918
    %v920 = vcombine.high %v912, %v912
    %v921 = vcombine.high %v919, %v919
    %v923 = vunpack.c.l.s4 1966171168
    %v924 = vunpack.c.0.s8 %v923
    %v925 = vlaneseq
    %v926 = vshrl.u32 %v925, 7
    %v927 = vsub.s32 %v924, %v926
    %v928 = vrot.slane %v912, %v927
    %v930 = vunpack.c.l.s4 1966171168
    %v931 = vunpack.c.0.s8 %v930
    %v932 = vlaneseq
    %v933 = vshrl.u32 %v932, 7
    %v934 = vsub.s32 %v931, %v933
    %v935 = vrot.slane %v919, %v934
    %v937 = vunpack.c.l.s4 1966171168
    %v938 = vunpack.c.0.s8 %v937
    %v939 = vlaneseq
    %v940 = vshrl.u32 %v939, 7
    %v941 = vsub.s32 %v938, %v940
    %v942 = vrot.slane %v920, %v941
    %v944 = vunpack.c.l.s4 1966171168
    %v945 = vunpack.c.0.s8 %v944
    %v946 = vlaneseq
    %v947 = vshrl.u32 %v946, 7
    %v948 = vsub.s32 %v945, %v947
    %v949 = vrot.slane %v921, %v948
    %v950 = vcombine.high %v928, %v928
    %v951 = vcombine.high %v935, %v935
    %v952 = vcombine.high %v942, %v942
    %v953 = vcombine.high %v949, %v949
    %970 = vst [vmem:[#allocation10 + $0x2] sm:$0x1] %v879
    %971 = vst [vmem:[#allocation10 + $0xa] sm:$0x1] %v893
    %972 = vst [vmem:[#allocation10 + $0x12] sm:$0x1] %v901
    %973 = vst [vmem:[#allocation10 + $0x1a] sm:$0x1] %v903
    %974 = vst [vmem:[#allocation10 + $0x22] sm:$0x1] %v886
    %975 = vst [vmem:[#allocation10 + $0x2a] sm:$0x1] %v900
    %976 = vst [vmem:[#allocation10 + $0x32] sm:$0x1] %v902
    %977 = vst [vmem:[#allocation10 + $0x3a] sm:$0x1] %v904
    %978 = vst [vmem:[#allocation10 + $0x42] sm:$0x1] %v928
    %979 = vst [vmem:[#allocation10 + $0x4a] sm:$0x1] %v942
    %980 = vst [vmem:[#allocation10 + $0x52] sm:$0x1] %v950
    %981 = vst [vmem:[#allocation10 + $0x5a] sm:$0x1] %v952
    %982 = vst [vmem:[#allocation10 + $0x62] sm:$0x1] %v935
    %983 = vst [vmem:[#allocation10 + $0x6a] sm:$0x1] %v949
    %984 = vst [vmem:[#allocation10 + $0x72] sm:$0x1] %v951
    %985 = vst [vmem:[#allocation10 + $0x7a] sm:$0x1] %v953
    %s986 = scalar_lea.vmem [#allocation8], 256
    %v987 = vld [vmem:[%s986] sm:$0xff]
    %v988 = vld [vmem:[%s986 + $0x8] sm:$0xff]
    %v989 = vld [vmem:[%s986 + $0x10] sm:$0xff]
    %v990 = vld [vmem:[%s986 + $0x18] sm:$0xff]
    %v991 = vld [vmem:[%s986 + $0x20] sm:$0xff]
    %v992 = vld [vmem:[%s986 + $0x28] sm:$0xff]
    %v993 = vld [vmem:[%s986 + $0x30] sm:$0xff]
    %v994 = vld [vmem:[%s986 + $0x38] sm:$0xff]
    %v995 = vld [vmem:[%s986 + $0x40] sm:$0xff]
    %v996 = vld [vmem:[%s986 + $0x48] sm:$0xff]
    %v997 = vld [vmem:[%s986 + $0x50] sm:$0xff]
    %v998 = vld [vmem:[%s986 + $0x58] sm:$0xff]
    %v999 = vld [vmem:[%s986 + $0x60] sm:$0xff]
    %v1000 = vld [vmem:[%s986 + $0x68] sm:$0xff]
    %v1001 = vld [vmem:[%s986 + $0x70] sm:$0xff]
    %v1002 = vld [vmem:[%s986 + $0x78] sm:$0xff]
    %1003 = vmatprep.subr.mxu0 0.0
    %1004 = vmatpush1.msra.mxu0 %v987
    %1005 = vmatprep.subr.mxu0 0.0
    %1006 = vmatpush1.msra.mxu0 %v988
    %1007 = vmatprep.subr.mxu0 0.0
    %1008 = vmatpush1.msra.mxu0 %v989
    %1009 = vmatprep.subr.mxu0 0.0
    %1010 = vmatpush1.msra.mxu0 %v990
    %1011 = vmatprep.subr.mxu0 0.0
    %1012 = vmatpush1.msra.mxu0 %v991
    %1013 = vmatprep.subr.mxu0 0.0
    %1014 = vmatpush1.msra.mxu0 %v992
    %1015 = vmatprep.subr.mxu0 0.0
    %1016 = vmatpush1.msra.mxu0 %v993
    %1017 = vmatprep.subr.mxu0 0.0
    %1018 = vmatpush1.msra.mxu0 %v994
    %1019 = vmatprep.subr.mxu0 0.0
    %1020 = vmatpush1.msra.mxu0 %v995
    %1021 = vmatprep.subr.mxu0 0.0
    %1022 = vmatpush1.msra.mxu0 %v996
    %1023 = vmatprep.subr.mxu0 0.0
    %1024 = vmatpush1.msra.mxu0 %v997
    %1025 = vmatprep.subr.mxu0 0.0
    %1026 = vmatpush1.msra.mxu0 %v998
    %1027 = vmatprep.subr.mxu0 0.0
    %1028 = vmatpush1.msra.mxu0 %v999
    %1029 = vmatprep.subr.mxu0 0.0
    %1030 = vmatpush1.msra.mxu0 %v1000
    %1031 = vmatprep.subr.mxu0 0.0
    %1032 = vmatpush1.msra.mxu0 %v1001
    %1033 = vmatprep.subr.mxu0 0.0
    %1034 = vmatpush1.msra.mxu0 %v1002
    %1035 = vmatprep.subr.mxu0 0.0
    %1036 = vmatpush1.msra.mxu0 0.0
    %1037 = vmatprep.subr.mxu0 0.0
    %1038 = vmatpush1.msra.mxu0 0.0
    %1039 = vmatprep.subr.mxu0 0.0
    %1040 = vmatpush1.msra.mxu0 0.0
    %1041 = vmatprep.subr.mxu0 0.0
    %1042 = vmatpush1.msra.mxu0 0.0
    %1043 = vmatprep.subr.mxu0 0.0
    %1044 = vmatpush1.msra.mxu0 0.0
    %1045 = vmatprep.subr.mxu0 0.0
    %1046 = vmatpush1.msra.mxu0 0.0
    %1047 = vmatprep.subr.mxu0 0.0
    %1048 = vmatpush1.msra.mxu0 0.0
    %1049 = vmatprep.subr.mxu0 0.0
    %1050 = vmatpush1.msra.mxu0 0.0
    %1051 = vmatprep.subr.mxu0 0.0
    %1052 = vmatpush1.msra.mxu0 0.0
    %1053 = vmatprep.subr.mxu0 0.0
    %1054 = vmatpush1.msra.mxu0 0.0
    %1055 = vmatprep.subr.mxu0 0.0
    %1056 = vmatpush1.msra.mxu0 0.0
    %1057 = vmatprep.subr.mxu0 0.0
    %1058 = vmatpush1.msra.mxu0 0.0
    %1059 = vmatprep.subr.mxu0 0.0
    %1060 = vmatpush1.msra.mxu0 0.0
    %1061 = vmatprep.subr.mxu0 0.0
    %1062 = vmatpush1.msra.mxu0 0.0
    %1063 = vmatprep.subr.mxu0 0.0
    %1064 = vmatpush1.msra.mxu0 0.0
    %1065 = vmatprep.subr.mxu0 0.0
    %1066 = vmatpush1.msra.mxu0 0.0
    %1067 = vmatprep.mubr.f32.mxu0 0.0
    %1068 = vmatmul.mubr.f32.gmra.mrb[0].mxu0 %v771
    %v1069 = vpop.f32.mrb[0].mxu0
    %v1070 = vadd.f32 0.0, %v1069
    %v1071 = vpop.f32.mrb[0].mxu0
    %1072 = vmatprep.mubr.f32.mxu0 0.0
    %1073 = vmatmul.mubr.f32.gmra.mrb[0].mxu0 %v776
    %v1074 = vpop.f32.mrb[0].mxu0
    %v1075 = vadd.f32 0.0, %v1074
    %v1076 = vpop.f32.mrb[0].mxu0
    %1077 = vdwg.mxu0
    %1078 = vmatprep.subr.mxu0 0.0
    %1079 = vmatpush1.msra.mxu0 %v73
    %1080 = vmatprep.subr.mxu0 0.0
    %1081 = vmatpush1.msra.mxu0 %v74
    %1082 = vmatprep.subr.mxu0 0.0
    %1083 = vmatpush1.msra.mxu0 %v75
    %1084 = vmatprep.subr.mxu0 0.0
    %1085 = vmatpush1.msra.mxu0 %v76
    %1086 = vmatprep.subr.mxu0 0.0
    %1087 = vmatpush1.msra.mxu0 %v77
    %1088 = vmatprep.subr.mxu0 0.0
    %1089 = vmatpush1.msra.mxu0 %v78
    %1090 = vmatprep.subr.mxu0 0.0
    %1091 = vmatpush1.msra.mxu0 %v79
    %1092 = vmatprep.subr.mxu0 0.0
    %1093 = vmatpush1.msra.mxu0 %v80
    %1094 = vmatprep.subr.mxu0 0.0
    %1095 = vmatpush1.msra.mxu0 %v81
    %1096 = vmatprep.subr.mxu0 0.0
    %1097 = vmatpush1.msra.mxu0 %v82
    %1098 = vmatprep.subr.mxu0 0.0
    %1099 = vmatpush1.msra.mxu0 %v83
    %1100 = vmatprep.subr.mxu0 0.0
    %1101 = vmatpush1.msra.mxu0 %v84
    %1102 = vmatprep.subr.mxu0 0.0
    %1103 = vmatpush1.msra.mxu0 %v85
    %1104 = vmatprep.subr.mxu0 0.0
    %1105 = vmatpush1.msra.mxu0 %v86
    %1106 = vmatprep.subr.mxu0 0.0
    %1107 = vmatpush1.msra.mxu0 %v87
    %1108 = vmatprep.subr.mxu0 0.0
    %1109 = vmatpush1.msra.mxu0 %v88
    %1110 = vmatprep.subr.mxu0 0.0
    %1111 = vmatpush1.msra.mxu0 0.0
    %1112 = vmatprep.subr.mxu0 0.0
    %1113 = vmatpush1.msra.mxu0 0.0
    %1114 = vmatprep.subr.mxu0 0.0
    %1115 = vmatpush1.msra.mxu0 0.0
    %1116 = vmatprep.subr.mxu0 0.0
    %1117 = vmatpush1.msra.mxu0 0.0
    %1118 = vmatprep.subr.mxu0 0.0
    %1119 = vmatpush1.msra.mxu0 0.0
    %1120 = vmatprep.subr.mxu0 0.0
    %1121 = vmatpush1.msra.mxu0 0.0
    %1122 = vmatprep.subr.mxu0 0.0
    %1123 = vmatpush1.msra.mxu0 0.0
    %1124 = vmatprep.subr.mxu0 0.0
    %1125 = vmatpush1.msra.mxu0 0.0
    %1126 = vmatprep.subr.mxu0 0.0
    %1127 = vmatpush1.msra.mxu0 0.0
    %1128 = vmatprep.subr.mxu0 0.0
    %1129 = vmatpush1.msra.mxu0 0.0
    %1130 = vmatprep.subr.mxu0 0.0
    %1131 = vmatpush1.msra.mxu0 0.0
    %1132 = vmatprep.subr.mxu0 0.0
    %1133 = vmatpush1.msra.mxu0 0.0
    %1134 = vmatprep.subr.mxu0 0.0
    %1135 = vmatpush1.msra.mxu0 0.0
    %1136 = vmatprep.subr.mxu0 0.0
    %1137 = vmatpush1.msra.mxu0 0.0
    %1138 = vmatprep.subr.mxu0 0.0
    %1139 = vmatpush1.msra.mxu0 0.0
    %1140 = vmatprep.subr.mxu0 0.0
    %1141 = vmatpush1.msra.mxu0 0.0
    %1142 = vmatprep.mubr.f32.mxu0 0.0
    %1143 = vmatmul.mubr.f32.gmra.mrb[0].mxu0 %v1070
    %v1144 = vpop.f32.mrb[0].mxu0
    %v1145 = vadd.f32 0.0, %v1144
    %v1146 = vpop.f32.mrb[0].mxu0
    %1147 = vmatprep.mubr.f32.mxu0 0.0
    %1148 = vmatmul.mubr.f32.gmra.mrb[0].mxu0 %v1075
    %v1149 = vpop.f32.mrb[0].mxu0
    %v1150 = vadd.f32 0.0, %v1149
    %v1151 = vpop.f32.mrb[0].mxu0
    %1152 = vdwg.mxu0
    %v1155 = vcombine.high %v1145, %v1145
    %v1157 = vunpack.c.l.s4 1966171168
    %v1158 = vunpack.c.0.s8 %v1157
    %v1159 = vlaneseq
    %v1160 = vshrl.u32 %v1159, 7
    %v1161 = vsub.s32 %v1158, %v1160
    %v1162 = vrot.slane %v1145, %v1161
    %v1164 = vunpack.c.l.s4 1966171168
    %v1165 = vunpack.c.0.s8 %v1164
    %v1166 = vlaneseq
    %v1167 = vshrl.u32 %v1166, 7
    %v1168 = vsub.s32 %v1165, %v1167
    %v1169 = vrot.slane %v1155, %v1168
    %v1170 = vcombine.high %v1162, %v1162
    %v1171 = vcombine.high %v1169, %v1169
    %v1173 = vunpack.c.l.s4 1966171168
    %v1174 = vunpack.c.0.s8 %v1173
    %v1175 = vlaneseq
    %v1176 = vshrl.u32 %v1175, 7
    %v1177 = vsub.s32 %v1174, %v1176
    %v1178 = vrot.slane %v1162, %v1177
    %v1180 = vunpack.c.l.s4 1966171168
    %v1181 = vunpack.c.0.s8 %v1180
    %v1182 = vlaneseq
    %v1183 = vshrl.u32 %v1182, 7
    %v1184 = vsub.s32 %v1181, %v1183
    %v1185 = vrot.slane %v1169, %v1184
    %v1187 = vunpack.c.l.s4 1966171168
    %v1188 = vunpack.c.0.s8 %v1187
    %v1189 = vlaneseq
    %v1190 = vshrl.u32 %v1189, 7
    %v1191 = vsub.s32 %v1188, %v1190
    %v1192 = vrot.slane %v1170, %v1191
    %v1194 = vunpack.c.l.s4 1966171168
    %v1195 = vunpack.c.0.s8 %v1194
    %v1196 = vlaneseq
    %v1197 = vshrl.u32 %v1196, 7
    %v1198 = vsub.s32 %v1195, %v1197
    %v1199 = vrot.slane %v1171, %v1198
    %v1200 = vcombine.high %v1178, %v1178
    %v1201 = vcombine.high %v1185, %v1185
    %v1202 = vcombine.high %v1192, %v1192
    %v1203 = vcombine.high %v1199, %v1199
    %v1204 = vcombine.high %v1150, %v1150
    %v1206 = vunpack.c.l.s4 1966171168
    %v1207 = vunpack.c.0.s8 %v1206
    %v1208 = vlaneseq
    %v1209 = vshrl.u32 %v1208, 7
    %v1210 = vsub.s32 %v1207, %v1209
    %v1211 = vrot.slane %v1150, %v1210
    %v1213 = vunpack.c.l.s4 1966171168
    %v1214 = vunpack.c.0.s8 %v1213
    %v1215 = vlaneseq
    %v1216 = vshrl.u32 %v1215, 7
    %v1217 = vsub.s32 %v1214, %v1216
    %v1218 = vrot.slane %v1204, %v1217
    %v1219 = vcombine.high %v1211, %v1211
    %v1220 = vcombine.high %v1218, %v1218
    %v1222 = vunpack.c.l.s4 1966171168
    %v1223 = vunpack.c.0.s8 %v1222
    %v1224 = vlaneseq
    %v1225 = vshrl.u32 %v1224, 7
    %v1226 = vsub.s32 %v1223, %v1225
    %v1227 = vrot.slane %v1211, %v1226
    %v1229 = vunpack.c.l.s4 1966171168
    %v1230 = vunpack.c.0.s8 %v1229
    %v1231 = vlaneseq
    %v1232 = vshrl.u32 %v1231, 7
    %v1233 = vsub.s32 %v1230, %v1232
    %v1234 = vrot.slane %v1218, %v1233
    %v1236 = vunpack.c.l.s4 1966171168
    %v1237 = vunpack.c.0.s8 %v1236
    %v1238 = vlaneseq
    %v1239 = vshrl.u32 %v1238, 7
    %v1240 = vsub.s32 %v1237, %v1239
    %v1241 = vrot.slane %v1219, %v1240
    %v1243 = vunpack.c.l.s4 1966171168
    %v1244 = vunpack.c.0.s8 %v1243
    %v1245 = vlaneseq
    %v1246 = vshrl.u32 %v1245, 7
    %v1247 = vsub.s32 %v1244, %v1246
    %v1248 = vrot.slane %v1220, %v1247
    %v1249 = vcombine.high %v1227, %v1227
    %v1250 = vcombine.high %v1234, %v1234
    %v1251 = vcombine.high %v1241, %v1241
    %v1252 = vcombine.high %v1248, %v1248
    %1269 = vst [vmem:[#allocation10 + $0x3] sm:$0x1] %v1178
    %1270 = vst [vmem:[#allocation10 + $0xb] sm:$0x1] %v1192
    %1271 = vst [vmem:[#allocation10 + $0x13] sm:$0x1] %v1200
    %1272 = vst [vmem:[#allocation10 + $0x1b] sm:$0x1] %v1202
    %1273 = vst [vmem:[#allocation10 + $0x23] sm:$0x1] %v1185
    %1274 = vst [vmem:[#allocation10 + $0x2b] sm:$0x1] %v1199
    %1275 = vst [vmem:[#allocation10 + $0x33] sm:$0x1] %v1201
    %1276 = vst [vmem:[#allocation10 + $0x3b] sm:$0x1] %v1203
    %1277 = vst [vmem:[#allocation10 + $0x43] sm:$0x1] %v1227
    %1278 = vst [vmem:[#allocation10 + $0x4b] sm:$0x1] %v1241
    %1279 = vst [vmem:[#allocation10 + $0x53] sm:$0x1] %v1249
    %1280 = vst [vmem:[#allocation10 + $0x5b] sm:$0x1] %v1251
    %1281 = vst [vmem:[#allocation10 + $0x63] sm:$0x1] %v1234
    %1282 = vst [vmem:[#allocation10 + $0x6b] sm:$0x1] %v1248
    %1283 = vst [vmem:[#allocation10 + $0x73] sm:$0x1] %v1250
    %1284 = vst [vmem:[#allocation10 + $0x7b] sm:$0x1] %v1252
    %s1285 = scalar_lea.vmem [#allocation8], 384
    %v1286 = vld [vmem:[%s1285] sm:$0xff]
    %v1287 = vld [vmem:[%s1285 + $0x8] sm:$0xff]
    %v1288 = vld [vmem:[%s1285 + $0x10] sm:$0xff]
    %v1289 = vld [vmem:[%s1285 + $0x18] sm:$0xff]
    %v1290 = vld [vmem:[%s1285 + $0x20] sm:$0xff]
    %v1291 = vld [vmem:[%s1285 + $0x28] sm:$0xff]
    %v1292 = vld [vmem:[%s1285 + $0x30] sm:$0xff]
    %v1293 = vld [vmem:[%s1285 + $0x38] sm:$0xff]
    %v1294 = vld [vmem:[%s1285 + $0x40] sm:$0xff]
    %v1295 = vld [vmem:[%s1285 + $0x48] sm:$0xff]
    %v1296 = vld [vmem:[%s1285 + $0x50] sm:$0xff]
    %v1297 = vld [vmem:[%s1285 + $0x58] sm:$0xff]
    %v1298 = vld [vmem:[%s1285 + $0x60] sm:$0xff]
    %v1299 = vld [vmem:[%s1285 + $0x68] sm:$0xff]
    %v1300 = vld [vmem:[%s1285 + $0x70] sm:$0xff]
    %v1301 = vld [vmem:[%s1285 + $0x78] sm:$0xff]
    %1302 = vmatprep.subr.mxu0 0.0
    %1303 = vmatpush1.msra.mxu0 %v1286
    %1304 = vmatprep.subr.mxu0 0.0
    %1305 = vmatpush1.msra.mxu0 %v1287
    %1306 = vmatprep.subr.mxu0 0.0
    %1307 = vmatpush1.msra.mxu0 %v1288
    %1308 = vmatprep.subr.mxu0 0.0
    %1309 = vmatpush1.msra.mxu0 %v1289
    %1310 = vmatprep.subr.mxu0 0.0
    %1311 = vmatpush1.msra.mxu0 %v1290
    %1312 = vmatprep.subr.mxu0 0.0
    %1313 = vmatpush1.msra.mxu0 %v1291
    %1314 = vmatprep.subr.mxu0 0.0
    %1315 = vmatpush1.msra.mxu0 %v1292
    %1316 = vmatprep.subr.mxu0 0.0
    %1317 = vmatpush1.msra.mxu0 %v1293
    %1318 = vmatprep.subr.mxu0 0.0
    %1319 = vmatpush1.msra.mxu0 %v1294
    %1320 = vmatprep.subr.mxu0 0.0
    %1321 = vmatpush1.msra.mxu0 %v1295
    %1322 = vmatprep.subr.mxu0 0.0
    %1323 = vmatpush1.msra.mxu0 %v1296
    %1324 = vmatprep.subr.mxu0 0.0
    %1325 = vmatpush1.msra.mxu0 %v1297
    %1326 = vmatprep.subr.mxu0 0.0
    %1327 = vmatpush1.msra.mxu0 %v1298
    %1328 = vmatprep.subr.mxu0 0.0
    %1329 = vmatpush1.msra.mxu0 %v1299
    %1330 = vmatprep.subr.mxu0 0.0
    %1331 = vmatpush1.msra.mxu0 %v1300
    %1332 = vmatprep.subr.mxu0 0.0
    %1333 = vmatpush1.msra.mxu0 %v1301
    %1334 = vmatprep.subr.mxu0 0.0
    %1335 = vmatpush1.msra.mxu0 0.0
    %1336 = vmatprep.subr.mxu0 0.0
    %1337 = vmatpush1.msra.mxu0 0.0
    %1338 = vmatprep.subr.mxu0 0.0
    %1339 = vmatpush1.msra.mxu0 0.0
    %1340 = vmatprep.subr.mxu0 0.0
    %1341 = vmatpush1.msra.mxu0 0.0
    %1342 = vmatprep.subr.mxu0 0.0
    %1343 = vmatpush1.msra.mxu0 0.0
    %1344 = vmatprep.subr.mxu0 0.0
    %1345 = vmatpush1.msra.mxu0 0.0
    %1346 = vmatprep.subr.mxu0 0.0
    %1347 = vmatpush1.msra.mxu0 0.0
    %1348 = vmatprep.subr.mxu0 0.0
    %1349 = vmatpush1.msra.mxu0 0.0
    %1350 = vmatprep.subr.mxu0 0.0
    %1351 = vmatpush1.msra.mxu0 0.0
    %1352 = vmatprep.subr.mxu0 0.0
    %1353 = vmatpush1.msra.mxu0 0.0
    %1354 = vmatprep.subr.mxu0 0.0
    %1355 = vmatpush1.msra.mxu0 0.0
    %1356 = vmatprep.subr.mxu0 0.0
    %1357 = vmatpush1.msra.mxu0 0.0
    %1358 = vmatprep.subr.mxu0 0.0
    %1359 = vmatpush1.msra.mxu0 0.0
    %1360 = vmatprep.subr.mxu0 0.0
    %1361 = vmatpush1.msra.mxu0 0.0
    %1362 = vmatprep.subr.mxu0 0.0
    %1363 = vmatpush1.msra.mxu0 0.0
    %1364 = vmatprep.subr.mxu0 0.0
    %1365 = vmatpush1.msra.mxu0 0.0
    %1366 = vmatprep.mubr.f32.mxu0 0.0
    %1367 = vmatmul.mubr.f32.gmra.mrb[0].mxu0 %v1070
    %v1368 = vpop.f32.mrb[0].mxu0
    %v1369 = vadd.f32 0.0, %v1368
    %v1370 = vpop.f32.mrb[0].mxu0
    %1371 = vmatprep.mubr.f32.mxu0 0.0
    %1372 = vmatmul.mubr.f32.gmra.mrb[0].mxu0 %v1075
    %v1373 = vpop.f32.mrb[0].mxu0
    %v1374 = vadd.f32 0.0, %v1373
    %v1375 = vpop.f32.mrb[0].mxu0
    %1376 = vdwg.mxu0
    %1377 = vmatprep.subr.mxu0 0.0
    %1378 = vmatpush1.msra.mxu0 %v73
    %1379 = vmatprep.subr.mxu0 0.0
    %1380 = vmatpush1.msra.mxu0 %v74
    %1381 = vmatprep.subr.mxu0 0.0
    %1382 = vmatpush1.msra.mxu0 %v75
    %1383 = vmatprep.subr.mxu0 0.0
    %1384 = vmatpush1.msra.mxu0 %v76
    %1385 = vmatprep.subr.mxu0 0.0
    %1386 = vmatpush1.msra.mxu0 %v77
    %1387 = vmatprep.subr.mxu0 0.0
    %1388 = vmatpush1.msra.mxu0 %v78
    %1389 = vmatprep.subr.mxu0 0.0
    %1390 = vmatpush1.msra.mxu0 %v79
    %1391 = vmatprep.subr.mxu0 0.0
    %1392 = vmatpush1.msra.mxu0 %v80
    %1393 = vmatprep.subr.mxu0 0.0
    %1394 = vmatpush1.msra.mxu0 %v81
    %1395 = vmatprep.subr.mxu0 0.0
    %1396 = vmatpush1.msra.mxu0 %v82
    %1397 = vmatprep.subr.mxu0 0.0
    %1398 = vmatpush1.msra.mxu0 %v83
    %1399 = vmatprep.subr.mxu0 0.0
    %1400 = vmatpush1.msra.mxu0 %v84
    %1401 = vmatprep.subr.mxu0 0.0
    %1402 = vmatpush1.msra.mxu0 %v85
    %1403 = vmatprep.subr.mxu0 0.0
    %1404 = vmatpush1.msra.mxu0 %v86
    %1405 = vmatprep.subr.mxu0 0.0
    %1406 = vmatpush1.msra.mxu0 %v87
    %1407 = vmatprep.subr.mxu0 0.0
    %1408 = vmatpush1.msra.mxu0 %v88
    %1409 = vmatprep.subr.mxu0 0.0
    %1410 = vmatpush1.msra.mxu0 0.0
    %1411 = vmatprep.subr.mxu0 0.0
    %1412 = vmatpush1.msra.mxu0 0.0
    %1413 = vmatprep.subr.mxu0 0.0
    %1414 = vmatpush1.msra.mxu0 0.0
    %1415 = vmatprep.subr.mxu0 0.0
    %1416 = vmatpush1.msra.mxu0 0.0
    %1417 = vmatprep.subr.mxu0 0.0
    %1418 = vmatpush1.msra.mxu0 0.0
    %1419 = vmatprep.subr.mxu0 0.0
    %1420 = vmatpush1.msra.mxu0 0.0
    %1421 = vmatprep.subr.mxu0 0.0
    %1422 = vmatpush1.msra.mxu0 0.0
    %1423 = vmatprep.subr.mxu0 0.0
    %1424 = vmatpush1.msra.mxu0 0.0
    %1425 = vmatprep.subr.mxu0 0.0
    %1426 = vmatpush1.msra.mxu0 0.0
    %1427 = vmatprep.subr.mxu0 0.0
    %1428 = vmatpush1.msra.mxu0 0.0
    %1429 = vmatprep.subr.mxu0 0.0
    %1430 = vmatpush1.msra.mxu0 0.0
    %1431 = vmatprep.subr.mxu0 0.0
    %1432 = vmatpush1.msra.mxu0 0.0
    %1433 = vmatprep.subr.mxu0 0.0
    %1434 = vmatpush1.msra.mxu0 0.0
    %1435 = vmatprep.subr.mxu0 0.0
    %1436 = vmatpush1.msra.mxu0 0.0
    %1437 = vmatprep.subr.mxu0 0.0
    %1438 = vmatpush1.msra.mxu0 0.0
    %1439 = vmatprep.subr.mxu0 0.0
    %1440 = vmatpush1.msra.mxu0 0.0
    %1441 = vmatprep.mubr.f32.mxu0 0.0
    %1442 = vmatmul.mubr.f32.gmra.mrb[0].mxu0 %v1369
    %v1443 = vpop.f32.mrb[0].mxu0
    %v1444 = vadd.f32 0.0, %v1443
    %v1445 = vpop.f32.mrb[0].mxu0
    %1446 = vmatprep.mubr.f32.mxu0 0.0
    %1447 = vmatmul.mubr.f32.gmra.mrb[0].mxu0 %v1374
    %v1448 = vpop.f32.mrb[0].mxu0
    %v1449 = vadd.f32 0.0, %v1448
    %v1450 = vpop.f32.mrb[0].mxu0
    %1451 = vdwg.mxu0
    %v1454 = vcombine.high %v1444, %v1444
    %v1456 = vunpack.c.l.s4 1966171168
    %v1457 = vunpack.c.0.s8 %v1456
    %v1458 = vlaneseq
    %v1459 = vshrl.u32 %v1458, 7
    %v1460 = vsub.s32 %v1457, %v1459
    %v1461 = vrot.slane %v1444, %v1460
    %v1463 = vunpack.c.l.s4 1966171168
    %v1464 = vunpack.c.0.s8 %v1463
    %v1465 = vlaneseq
    %v1466 = vshrl.u32 %v1465, 7
    %v1467 = vsub.s32 %v1464, %v1466
    %v1468 = vrot.slane %v1454, %v1467
    %v1469 = vcombine.high %v1461, %v1461
    %v1470 = vcombine.high %v1468, %v1468
    %v1472 = vunpack.c.l.s4 1966171168
    %v1473 = vunpack.c.0.s8 %v1472
    %v1474 = vlaneseq
    %v1475 = vshrl.u32 %v1474, 7
    %v1476 = vsub.s32 %v1473, %v1475
    %v1477 = vrot.slane %v1461, %v1476
    %v1479 = vunpack.c.l.s4 1966171168
    %v1480 = vunpack.c.0.s8 %v1479
    %v1481 = vlaneseq
    %v1482 = vshrl.u32 %v1481, 7
    %v1483 = vsub.s32 %v1480, %v1482
    %v1484 = vrot.slane %v1468, %v1483
    %v1486 = vunpack.c.l.s4 1966171168
    %v1487 = vunpack.c.0.s8 %v1486
    %v1488 = vlaneseq
    %v1489 = vshrl.u32 %v1488, 7
    %v1490 = vsub.s32 %v1487, %v1489
    %v1491 = vrot.slane %v1469, %v1490
    %v1493 = vunpack.c.l.s4 1966171168
    %v1494 = vunpack.c.0.s8 %v1493
    %v1495 = vlaneseq
    %v1496 = vshrl.u32 %v1495, 7
    %v1497 = vsub.s32 %v1494, %v1496
    %v1498 = vrot.slane %v1470, %v1497
    %v1499 = vcombine.high %v1477, %v1477
    %v1500 = vcombine.high %v1484, %v1484
    %v1501 = vcombine.high %v1491, %v1491
    %v1502 = vcombine.high %v1498, %v1498
    %v1503 = vcombine.high %v1449, %v1449
    %v1505 = vunpack.c.l.s4 1966171168
    %v1506 = vunpack.c.0.s8 %v1505
    %v1507 = vlaneseq
    %v1508 = vshrl.u32 %v1507, 7
    %v1509 = vsub.s32 %v1506, %v1508
    %v1510 = vrot.slane %v1449, %v1509
    %v1512 = vunpack.c.l.s4 1966171168
    %v1513 = vunpack.c.0.s8 %v1512
    %v1514 = vlaneseq
    %v1515 = vshrl.u32 %v1514, 7
    %v1516 = vsub.s32 %v1513, %v1515
    %v1517 = vrot.slane %v1503, %v1516
    %v1518 = vcombine.high %v1510, %v1510
    %v1519 = vcombine.high %v1517, %v1517
    %v1521 = vunpack.c.l.s4 1966171168
    %v1522 = vunpack.c.0.s8 %v1521
    %v1523 = vlaneseq
    %v1524 = vshrl.u32 %v1523, 7
    %v1525 = vsub.s32 %v1522, %v1524
    %v1526 = vrot.slane %v1510, %v1525
    %v1528 = vunpack.c.l.s4 1966171168
    %v1529 = vunpack.c.0.s8 %v1528
    %v1530 = vlaneseq
    %v1531 = vshrl.u32 %v1530, 7
    %v1532 = vsub.s32 %v1529, %v1531
    %v1533 = vrot.slane %v1517, %v1532
    %v1535 = vunpack.c.l.s4 1966171168
    %v1536 = vunpack.c.0.s8 %v1535
    %v1537 = vlaneseq
    %v1538 = vshrl.u32 %v1537, 7
    %v1539 = vsub.s32 %v1536, %v1538
    %v1540 = vrot.slane %v1518, %v1539
    %v1542 = vunpack.c.l.s4 1966171168
    %v1543 = vunpack.c.0.s8 %v1542
    %v1544 = vlaneseq
    %v1545 = vshrl.u32 %v1544, 7
    %v1546 = vsub.s32 %v1543, %v1545
    %v1547 = vrot.slane %v1519, %v1546
    %v1548 = vcombine.high %v1526, %v1526
    %v1549 = vcombine.high %v1533, %v1533
    %v1550 = vcombine.high %v1540, %v1540
    %v1551 = vcombine.high %v1547, %v1547
    %1568 = vst [vmem:[#allocation10 + $0x4] sm:$0x1] %v1477
    %1569 = vst [vmem:[#allocation10 + $0xc] sm:$0x1] %v1491
    %1570 = vst [vmem:[#allocation10 + $0x14] sm:$0x1] %v1499
    %1571 = vst [vmem:[#allocation10 + $0x1c] sm:$0x1] %v1501
    %1572 = vst [vmem:[#allocation10 + $0x24] sm:$0x1] %v1484
    %1573 = vst [vmem:[#allocation10 + $0x2c] sm:$0x1] %v1498
    %1574 = vst [vmem:[#allocation10 + $0x34] sm:$0x1] %v1500
    %1575 = vst [vmem:[#allocation10 + $0x3c] sm:$0x1] %v1502
    %1576 = vst [vmem:[#allocation10 + $0x44] sm:$0x1] %v1526
    %1577 = vst [vmem:[#allocation10 + $0x4c] sm:$0x1] %v1540
    %1578 = vst [vmem:[#allocation10 + $0x54] sm:$0x1] %v1548
    %1579 = vst [vmem:[#allocation10 + $0x5c] sm:$0x1] %v1550
    %1580 = vst [vmem:[#allocation10 + $0x64] sm:$0x1] %v1533
    %1581 = vst [vmem:[#allocation10 + $0x6c] sm:$0x1] %v1547
    %1582 = vst [vmem:[#allocation10 + $0x74] sm:$0x1] %v1549
    %1583 = vst [vmem:[#allocation10 + $0x7c] sm:$0x1] %v1551
    %s1584 = scalar_lea.vmem [#allocation8], 512
    %v1585 = vld [vmem:[%s1584] sm:$0xff]
    %v1586 = vld [vmem:[%s1584 + $0x8] sm:$0xff]
    %v1587 = vld [vmem:[%s1584 + $0x10] sm:$0xff]
    %v1588 = vld [vmem:[%s1584 + $0x18] sm:$0xff]
    %v1589 = vld [vmem:[%s1584 + $0x20] sm:$0xff]
    %v1590 = vld [vmem:[%s1584 + $0x28] sm:$0xff]
    %v1591 = vld [vmem:[%s1584 + $0x30] sm:$0xff]
    %v1592 = vld [vmem:[%s1584 + $0x38] sm:$0xff]
    %v1593 = vld [vmem:[%s1584 + $0x40] sm:$0xff]
    %v1594 = vld [vmem:[%s1584 + $0x48] sm:$0xff]
    %v1595 = vld [vmem:[%s1584 + $0x50] sm:$0xff]
    %v1596 = vld [vmem:[%s1584 + $0x58] sm:$0xff]
    %v1597 = vld [vmem:[%s1584 + $0x60] sm:$0xff]
    %v1598 = vld [vmem:[%s1584 + $0x68] sm:$0xff]
    %v1599 = vld [vmem:[%s1584 + $0x70] sm:$0xff]
    %v1600 = vld [vmem:[%s1584 + $0x78] sm:$0xff]
    %1601 = vmatprep.subr.mxu0 0.0
    %1602 = vmatpush1.msra.mxu0 %v1585
    %1603 = vmatprep.subr.mxu0 0.0
    %1604 = vmatpush1.msra.mxu0 %v1586
    %1605 = vmatprep.subr.mxu0 0.0
    %1606 = vmatpush1.msra.mxu0 %v1587
    %1607 = vmatprep.subr.mxu0 0.0
    %1608 = vmatpush1.msra.mxu0 %v1588
    %1609 = vmatprep.subr.mxu0 0.0
    %1610 = vmatpush1.msra.mxu0 %v1589
    %1611 = vmatprep.subr.mxu0 0.0
    %1612 = vmatpush1.msra.mxu0 %v1590
    %1613 = vmatprep.subr.mxu0 0.0
    %1614 = vmatpush1.msra.mxu0 %v1591
    %1615 = vmatprep.subr.mxu0 0.0
    %1616 = vmatpush1.msra.mxu0 %v1592
    %1617 = vmatprep.subr.mxu0 0.0
    %1618 = vmatpush1.msra.mxu0 %v1593
    %1619 = vmatprep.subr.mxu0 0.0
    %1620 = vmatpush1.msra.mxu0 %v1594
    %1621 = vmatprep.subr.mxu0 0.0
    %1622 = vmatpush1.msra.mxu0 %v1595
    %1623 = vmatprep.subr.mxu0 0.0
    %1624 = vmatpush1.msra.mxu0 %v1596
    %1625 = vmatprep.subr.mxu0 0.0
    %1626 = vmatpush1.msra.mxu0 %v1597
    %1627 = vmatprep.subr.mxu0 0.0
    %1628 = vmatpush1.msra.mxu0 %v1598
    %1629 = vmatprep.subr.mxu0 0.0
    %1630 = vmatpush1.msra.mxu0 %v1599
    %1631 = vmatprep.subr.mxu0 0.0
    %1632 = vmatpush1.msra.mxu0 %v1600
    %1633 = vmatprep.subr.mxu0 0.0
    %1634 = vmatpush1.msra.mxu0 0.0
    %1635 = vmatprep.subr.mxu0 0.0
    %1636 = vmatpush1.msra.mxu0 0.0
    %1637 = vmatprep.subr.mxu0 0.0
    %1638 = vmatpush1.msra.mxu0 0.0
    %1639 = vmatprep.subr.mxu0 0.0
    %1640 = vmatpush1.msra.mxu0 0.0
    %1641 = vmatprep.subr.mxu0 0.0
    %1642 = vmatpush1.msra.mxu0 0.0
    %1643 = vmatprep.subr.mxu0 0.0
    %1644 = vmatpush1.msra.mxu0 0.0
    %1645 = vmatprep.subr.mxu0 0.0
    %1646 = vmatpush1.msra.mxu0 0.0
    %1647 = vmatprep.subr.mxu0 0.0
    %1648 = vmatpush1.msra.mxu0 0.0
    %1649 = vmatprep.subr.mxu0 0.0
    %1650 = vmatpush1.msra.mxu0 0.0
    %1651 = vmatprep.subr.mxu0 0.0
    %1652 = vmatpush1.msra.mxu0 0.0
    %1653 = vmatprep.subr.mxu0 0.0
    %1654 = vmatpush1.msra.mxu0 0.0
    %1655 = vmatprep.subr.mxu0 0.0
    %1656 = vmatpush1.msra.mxu0 0.0
    %1657 = vmatprep.subr.mxu0 0.0
    %1658 = vmatpush1.msra.mxu0 0.0
    %1659 = vmatprep.subr.mxu0 0.0
    %1660 = vmatpush1.msra.mxu0 0.0
    %1661 = vmatprep.subr.mxu0 0.0
    %1662 = vmatpush1.msra.mxu0 0.0
    %1663 = vmatprep.subr.mxu0 0.0
    %1664 = vmatpush1.msra.mxu0 0.0
    %1665 = vmatprep.mubr.f32.mxu0 0.0
    %1666 = vmatmul.mubr.f32.gmra.mrb[0].mxu0 %v1369
    %v1667 = vpop.f32.mrb[0].mxu0
    %v1668 = vadd.f32 0.0, %v1667
    %v1669 = vpop.f32.mrb[0].mxu0
    %1670 = vmatprep.mubr.f32.mxu0 0.0
    %1671 = vmatmul.mubr.f32.gmra.mrb[0].mxu0 %v1374
    %v1672 = vpop.f32.mrb[0].mxu0
    %v1673 = vadd.f32 0.0, %v1672
    %v1674 = vpop.f32.mrb[0].mxu0
    %1675 = vdwg.mxu0
    %1676 = vmatprep.subr.mxu0 0.0
    %1677 = vmatpush1.msra.mxu0 %v73
    %1678 = vmatprep.subr.mxu0 0.0
    %1679 = vmatpush1.msra.mxu0 %v74
    %1680 = vmatprep.subr.mxu0 0.0
    %1681 = vmatpush1.msra.mxu0 %v75
    %1682 = vmatprep.subr.mxu0 0.0
    %1683 = vmatpush1.msra.mxu0 %v76
    %1684 = vmatprep.subr.mxu0 0.0
    %1685 = vmatpush1.msra.mxu0 %v77
    %1686 = vmatprep.subr.mxu0 0.0
    %1687 = vmatpush1.msra.mxu0 %v78
    %1688 = vmatprep.subr.mxu0 0.0
    %1689 = vmatpush1.msra.mxu0 %v79
    %1690 = vmatprep.subr.mxu0 0.0
    %1691 = vmatpush1.msra.mxu0 %v80
    %1692 = vmatprep.subr.mxu0 0.0
    %1693 = vmatpush1.msra.mxu0 %v81
    %1694 = vmatprep.subr.mxu0 0.0
    %1695 = vmatpush1.msra.mxu0 %v82
    %1696 = vmatprep.subr.mxu0 0.0
    %1697 = vmatpush1.msra.mxu0 %v83
    %1698 = vmatprep.subr.mxu0 0.0
    %1699 = vmatpush1.msra.mxu0 %v84
    %1700 = vmatprep.subr.mxu0 0.0
    %1701 = vmatpush1.msra.mxu0 %v85
    %1702 = vmatprep.subr.mxu0 0.0
    %1703 = vmatpush1.msra.mxu0 %v86
    %1704 = vmatprep.subr.mxu0 0.0
    %1705 = vmatpush1.msra.mxu0 %v87
    %1706 = vmatprep.subr.mxu0 0.0
    %1707 = vmatpush1.msra.mxu0 %v88
    %1708 = vmatprep.subr.mxu0 0.0
    %1709 = vmatpush1.msra.mxu0 0.0
    %1710 = vmatprep.subr.mxu0 0.0
    %1711 = vmatpush1.msra.mxu0 0.0
    %1712 = vmatprep.subr.mxu0 0.0
    %1713 = vmatpush1.msra.mxu0 0.0
    %1714 = vmatprep.subr.mxu0 0.0
    %1715 = vmatpush1.msra.mxu0 0.0
    %1716 = vmatprep.subr.mxu0 0.0
    %1717 = vmatpush1.msra.mxu0 0.0
    %1718 = vmatprep.subr.mxu0 0.0
    %1719 = vmatpush1.msra.mxu0 0.0
    %1720 = vmatprep.subr.mxu0 0.0
    %1721 = vmatpush1.msra.mxu0 0.0
    %1722 = vmatprep.subr.mxu0 0.0
    %1723 = vmatpush1.msra.mxu0 0.0
    %1724 = vmatprep.subr.mxu0 0.0
    %1725 = vmatpush1.msra.mxu0 0.0
    %1726 = vmatprep.subr.mxu0 0.0
    %1727 = vmatpush1.msra.mxu0 0.0
    %1728 = vmatprep.subr.mxu0 0.0
    %1729 = vmatpush1.msra.mxu0 0.0
    %1730 = vmatprep.subr.mxu0 0.0
    %1731 = vmatpush1.msra.mxu0 0.0
    %1732 = vmatprep.subr.mxu0 0.0
    %1733 = vmatpush1.msra.mxu0 0.0
    %1734 = vmatprep.subr.mxu0 0.0
    %1735 = vmatpush1.msra.mxu0 0.0
    %1736 = vmatprep.subr.mxu0 0.0
    %1737 = vmatpush1.msra.mxu0 0.0
    %1738 = vmatprep.subr.mxu0 0.0
    %1739 = vmatpush1.msra.mxu0 0.0
    %1740 = vmatprep.mubr.f32.mxu0 0.0
    %1741 = vmatmul.mubr.f32.gmra.mrb[0].mxu0 %v1668
    %v1742 = vpop.f32.mrb[0].mxu0
    %v1743 = vadd.f32 0.0, %v1742
    %v1744 = vpop.f32.mrb[0].mxu0
    %1745 = vmatprep.mubr.f32.mxu0 0.0
    %1746 = vmatmul.mubr.f32.gmra.mrb[0].mxu0 %v1673
    %v1747 = vpop.f32.mrb[0].mxu0
    %v1748 = vadd.f32 0.0, %v1747
    %v1749 = vpop.f32.mrb[0].mxu0
    %1750 = vdwg.mxu0
    %v1753 = vcombine.high %v1743, %v1743
    %v1755 = vunpack.c.l.s4 1966171168
    %v1756 = vunpack.c.0.s8 %v1755
    %v1757 = vlaneseq
    %v1758 = vshrl.u32 %v1757, 7
    %v1759 = vsub.s32 %v1756, %v1758
    %v1760 = vrot.slane %v1743, %v1759
    %v1762 = vunpack.c.l.s4 1966171168
    %v1763 = vunpack.c.0.s8 %v1762
    %v1764 = vlaneseq
    %v1765 = vshrl.u32 %v1764, 7
    %v1766 = vsub.s32 %v1763, %v1765
    %v1767 = vrot.slane %v1753, %v1766
    %v1768 = vcombine.high %v1760, %v1760
    %v1769 = vcombine.high %v1767, %v1767
    %v1771 = vunpack.c.l.s4 1966171168
    %v1772 = vunpack.c.0.s8 %v1771
    %v1773 = vlaneseq
    %v1774 = vshrl.u32 %v1773, 7
    %v1775 = vsub.s32 %v1772, %v1774
    %v1776 = vrot.slane %v1760, %v1775
    %v1778 = vunpack.c.l.s4 1966171168
    %v1779 = vunpack.c.0.s8 %v1778
    %v1780 = vlaneseq
    %v1781 = vshrl.u32 %v1780, 7
    %v1782 = vsub.s32 %v1779, %v1781
    %v1783 = vrot.slane %v1767, %v1782
    %v1785 = vunpack.c.l.s4 1966171168
    %v1786 = vunpack.c.0.s8 %v1785
    %v1787 = vlaneseq
    %v1788 = vshrl.u32 %v1787, 7
    %v1789 = vsub.s32 %v1786, %v1788
    %v1790 = vrot.slane %v1768, %v1789
    %v1792 = vunpack.c.l.s4 1966171168
    %v1793 = vunpack.c.0.s8 %v1792
    %v1794 = vlaneseq
    %v1795 = vshrl.u32 %v1794, 7
    %v1796 = vsub.s32 %v1793, %v1795
    %v1797 = vrot.slane %v1769, %v1796
    %v1798 = vcombine.high %v1776, %v1776
    %v1799 = vcombine.high %v1783, %v1783
    %v1800 = vcombine.high %v1790, %v1790
    %v1801 = vcombine.high %v1797, %v1797
    %v1802 = vcombine.high %v1748, %v1748
    %v1804 = vunpack.c.l.s4 1966171168
    %v1805 = vunpack.c.0.s8 %v1804
    %v1806 = vlaneseq
    %v1807 = vshrl.u32 %v1806, 7
    %v1808 = vsub.s32 %v1805, %v1807
    %v1809 = vrot.slane %v1748, %v1808
    %v1811 = vunpack.c.l.s4 1966171168
    %v1812 = vunpack.c.0.s8 %v1811
    %v1813 = vlaneseq
    %v1814 = vshrl.u32 %v1813, 7
    %v1815 = vsub.s32 %v1812, %v1814
    %v1816 = vrot.slane %v1802, %v1815
    %v1817 = vcombine.high %v1809, %v1809
    %v1818 = vcombine.high %v1816, %v1816
    %v1820 = vunpack.c.l.s4 1966171168
    %v1821 = vunpack.c.0.s8 %v1820
    %v1822 = vlaneseq
    %v1823 = vshrl.u32 %v1822, 7
    %v1824 = vsub.s32 %v1821, %v1823
    %v1825 = vrot.slane %v1809, %v1824
    %v1827 = vunpack.c.l.s4 1966171168
    %v1828 = vunpack.c.0.s8 %v1827
    %v1829 = vlaneseq
    %v1830 = vshrl.u32 %v1829, 7
    %v1831 = vsub.s32 %v1828, %v1830
    %v1832 = vrot.slane %v1816, %v1831
    %v1834 = vunpack.c.l.s4 1966171168
    %v1835 = vunpack.c.0.s8 %v1834
    %v1836 = vlaneseq
    %v1837 = vshrl.u32 %v1836, 7
    %v1838 = vsub.s32 %v1835, %v1837
    %v1839 = vrot.slane %v1817, %v1838
    %v1841 = vunpack.c.l.s4 1966171168
    %v1842 = vunpack.c.0.s8 %v1841
    %v1843 = vlaneseq
    %v1844 = vshrl.u32 %v1843, 7
    %v1845 = vsub.s32 %v1842, %v1844
    %v1846 = vrot.slane %v1818, %v1845
    %v1847 = vcombine.high %v1825, %v1825
    %v1848 = vcombine.high %v1832, %v1832
    %v1849 = vcombine.high %v1839, %v1839
    %v1850 = vcombine.high %v1846, %v1846
    %1867 = vst [vmem:[#allocation10 + $0x5] sm:$0x1] %v1776
    %1868 = vst [vmem:[#allocation10 + $0xd] sm:$0x1] %v1790
    %1869 = vst [vmem:[#allocation10 + $0x15] sm:$0x1] %v1798
    %1870 = vst [vmem:[#allocation10 + $0x1d] sm:$0x1] %v1800
    %1871 = vst [vmem:[#allocation10 + $0x25] sm:$0x1] %v1783
    %1872 = vst [vmem:[#allocation10 + $0x2d] sm:$0x1] %v1797
    %1873 = vst [vmem:[#allocation10 + $0x35] sm:$0x1] %v1799
    %1874 = vst [vmem:[#allocation10 + $0x3d] sm:$0x1] %v1801
    %1875 = vst [vmem:[#allocation10 + $0x45] sm:$0x1] %v1825
    %1876 = vst [vmem:[#allocation10 + $0x4d] sm:$0x1] %v1839
    %1877 = vst [vmem:[#allocation10 + $0x55] sm:$0x1] %v1847
    %1878 = vst [vmem:[#allocation10 + $0x5d] sm:$0x1] %v1849
    %1879 = vst [vmem:[#allocation10 + $0x65] sm:$0x1] %v1832
    %1880 = vst [vmem:[#allocation10 + $0x6d] sm:$0x1] %v1846
    %1881 = vst [vmem:[#allocation10 + $0x75] sm:$0x1] %v1848
    %1882 = vst [vmem:[#allocation10 + $0x7d] sm:$0x1] %v1850
    %s1883 = scalar_lea.vmem [#allocation8], 640
    %v1884 = vld [vmem:[%s1883] sm:$0xff]
    %v1885 = vld [vmem:[%s1883 + $0x8] sm:$0xff]
    %v1886 = vld [vmem:[%s1883 + $0x10] sm:$0xff]
    %v1887 = vld [vmem:[%s1883 + $0x18] sm:$0xff]
    %v1888 = vld [vmem:[%s1883 + $0x20] sm:$0xff]
    %v1889 = vld [vmem:[%s1883 + $0x28] sm:$0xff]
    %v1890 = vld [vmem:[%s1883 + $0x30] sm:$0xff]
    %v1891 = vld [vmem:[%s1883 + $0x38] sm:$0xff]
    %v1892 = vld [vmem:[%s1883 + $0x40] sm:$0xff]
    %v1893 = vld [vmem:[%s1883 + $0x48] sm:$0xff]
    %v1894 = vld [vmem:[%s1883 + $0x50] sm:$0xff]
    %v1895 = vld [vmem:[%s1883 + $0x58] sm:$0xff]
    %v1896 = vld [vmem:[%s1883 + $0x60] sm:$0xff]
    %v1897 = vld [vmem:[%s1883 + $0x68] sm:$0xff]
    %v1898 = vld [vmem:[%s1883 + $0x70] sm:$0xff]
    %v1899 = vld [vmem:[%s1883 + $0x78] sm:$0xff]
    %1900 = vmatprep.subr.mxu0 0.0
    %1901 = vmatpush1.msra.mxu0 %v1884
    %1902 = vmatprep.subr.mxu0 0.0
    %1903 = vmatpush1.msra.mxu0 %v1885
    %1904 = vmatprep.subr.mxu0 0.0
    %1905 = vmatpush1.msra.mxu0 %v1886
    %1906 = vmatprep.subr.mxu0 0.0
    %1907 = vmatpush1.msra.mxu0 %v1887
    %1908 = vmatprep.subr.mxu0 0.0
    %1909 = vmatpush1.msra.mxu0 %v1888
    %1910 = vmatprep.subr.mxu0 0.0
    %1911 = vmatpush1.msra.mxu0 %v1889
    %1912 = vmatprep.subr.mxu0 0.0
    %1913 = vmatpush1.msra.mxu0 %v1890
    %1914 = vmatprep.subr.mxu0 0.0
    %1915 = vmatpush1.msra.mxu0 %v1891
    %1916 = vmatprep.subr.mxu0 0.0
    %1917 = vmatpush1.msra.mxu0 %v1892
    %1918 = vmatprep.subr.mxu0 0.0
    %1919 = vmatpush1.msra.mxu0 %v1893
    %1920 = vmatprep.subr.mxu0 0.0
    %1921 = vmatpush1.msra.mxu0 %v1894
    %1922 = vmatprep.subr.mxu0 0.0
    %1923 = vmatpush1.msra.mxu0 %v1895
    %1924 = vmatprep.subr.mxu0 0.0
    %1925 = vmatpush1.msra.mxu0 %v1896
    %1926 = vmatprep.subr.mxu0 0.0
    %1927 = vmatpush1.msra.mxu0 %v1897
    %1928 = vmatprep.subr.mxu0 0.0
    %1929 = vmatpush1.msra.mxu0 %v1898
    %1930 = vmatprep.subr.mxu0 0.0
    %1931 = vmatpush1.msra.mxu0 %v1899
    %1932 = vmatprep.subr.mxu0 0.0
    %1933 = vmatpush1.msra.mxu0 0.0
    %1934 = vmatprep.subr.mxu0 0.0
    %1935 = vmatpush1.msra.mxu0 0.0
    %1936 = vmatprep.subr.mxu0 0.0
    %1937 = vmatpush1.msra.mxu0 0.0
    %1938 = vmatprep.subr.mxu0 0.0
    %1939 = vmatpush1.msra.mxu0 0.0
    %1940 = vmatprep.subr.mxu0 0.0
    %1941 = vmatpush1.msra.mxu0 0.0
    %1942 = vmatprep.subr.mxu0 0.0
    %1943 = vmatpush1.msra.mxu0 0.0
    %1944 = vmatprep.subr.mxu0 0.0
    %1945 = vmatpush1.msra.mxu0 0.0
    %1946 = vmatprep.subr.mxu0 0.0
    %1947 = vmatpush1.msra.mxu0 0.0
    %1948 = vmatprep.subr.mxu0 0.0
    %1949 = vmatpush1.msra.mxu0 0.0
    %1950 = vmatprep.subr.mxu0 0.0
    %1951 = vmatpush1.msra.mxu0 0.0
    %1952 = vmatprep.subr.mxu0 0.0
    %1953 = vmatpush1.msra.mxu0 0.0
    %1954 = vmatprep.subr.mxu0 0.0
    %1955 = vmatpush1.msra.mxu0 0.0
    %1956 = vmatprep.subr.mxu0 0.0
    %1957 = vmatpush1.msra.mxu0 0.0
    %1958 = vmatprep.subr.mxu0 0.0
    %1959 = vmatpush1.msra.mxu0 0.0
    %1960 = vmatprep.subr.mxu0 0.0
    %1961 = vmatpush1.msra.mxu0 0.0
    %1962 = vmatprep.subr.mxu0 0.0
    %1963 = vmatpush1.msra.mxu0 0.0
    %1964 = vmatprep.mubr.f32.mxu0 0.0
    %1965 = vmatmul.mubr.f32.gmra.mrb[0].mxu0 %v1668
    %v1966 = vpop.f32.mrb[0].mxu0
    %v1967 = vadd.f32 0.0, %v1966
    %v1968 = vpop.f32.mrb[0].mxu0
    %1969 = vmatprep.mubr.f32.mxu0 0.0
    %1970 = vmatmul.mubr.f32.gmra.mrb[0].mxu0 %v1673
    %v1971 = vpop.f32.mrb[0].mxu0
    %v1972 = vadd.f32 0.0, %v1971
    %v1973 = vpop.f32.mrb[0].mxu0
    %1974 = vdwg.mxu0
    %1975 = vmatprep.subr.mxu0 0.0
    %1976 = vmatpush1.msra.mxu0 %v73
    %1977 = vmatprep.subr.mxu0 0.0
    %1978 = vmatpush1.msra.mxu0 %v74
    %1979 = vmatprep.subr.mxu0 0.0
    %1980 = vmatpush1.msra.mxu0 %v75
    %1981 = vmatprep.subr.mxu0 0.0
    %1982 = vmatpush1.msra.mxu0 %v76
    %1983 = vmatprep.subr.mxu0 0.0
    %1984 = vmatpush1.msra.mxu0 %v77
    %1985 = vmatprep.subr.mxu0 0.0
    %1986 = vmatpush1.msra.mxu0 %v78
    %1987 = vmatprep.subr.mxu0 0.0
    %1988 = vmatpush1.msra.mxu0 %v79
    %1989 = vmatprep.subr.mxu0 0.0
    %1990 = vmatpush1.msra.mxu0 %v80
    %1991 = vmatprep.subr.mxu0 0.0
    %1992 = vmatpush1.msra.mxu0 %v81
    %1993 = vmatprep.subr.mxu0 0.0
    %1994 = vmatpush1.msra.mxu0 %v82
    %1995 = vmatprep.subr.mxu0 0.0
    %1996 = vmatpush1.msra.mxu0 %v83
    %1997 = vmatprep.subr.mxu0 0.0
    %1998 = vmatpush1.msra.mxu0 %v84
    %1999 = vmatprep.subr.mxu0 0.0
    %2000 = vmatpush1.msra.mxu0 %v85
    %2001 = vmatprep.subr.mxu0 0.0
    %2002 = vmatpush1.msra.mxu0 %v86
    %2003 = vmatprep.subr.mxu0 0.0
    %2004 = vmatpush1.msra.mxu0 %v87
    %2005 = vmatprep.subr.mxu0 0.0
    %2006 = vmatpush1.msra.mxu0 %v88
    %2007 = vmatprep.subr.mxu0 0.0
    %2008 = vmatpush1.msra.mxu0 0.0
    %2009 = vmatprep.subr.mxu0 0.0
    %2010 = vmatpush1.msra.mxu0 0.0
    %2011 = vmatprep.subr.mxu0 0.0
    %2012 = vmatpush1.msra.mxu0 0.0
    %2013 = vmatprep.subr.mxu0 0.0
    %2014 = vmatpush1.msra.mxu0 0.0
    %2015 = vmatprep.subr.mxu0 0.0
    %2016 = vmatpush1.msra.mxu0 0.0
    %2017 = vmatprep.subr.mxu0 0.0
    %2018 = vmatpush1.msra.mxu0 0.0
    %2019 = vmatprep.subr.mxu0 0.0
    %2020 = vmatpush1.msra.mxu0 0.0
    %2021 = vmatprep.subr.mxu0 0.0
    %2022 = vmatpush1.msra.mxu0 0.0
    %2023 = vmatprep.subr.mxu0 0.0
    %2024 = vmatpush1.msra.mxu0 0.0
    %2025 = vmatprep.subr.mxu0 0.0
    %2026 = vmatpush1.msra.mxu0 0.0
    %2027 = vmatprep.subr.mxu0 0.0
    %2028 = vmatpush1.msra.mxu0 0.0
    %2029 = vmatprep.subr.mxu0 0.0
    %2030 = vmatpush1.msra.mxu0 0.0
    %2031 = vmatprep.subr.mxu0 0.0
    %2032 = vmatpush1.msra.mxu0 0.0
    %2033 = vmatprep.subr.mxu0 0.0
    %2034 = vmatpush1.msra.mxu0 0.0
    %2035 = vmatprep.subr.mxu0 0.0
    %2036 = vmatpush1.msra.mxu0 0.0
    %2037 = vmatprep.subr.mxu0 0.0
    %2038 = vmatpush1.msra.mxu0 0.0
    %2039 = vmatprep.mubr.f32.mxu0 0.0
    %2040 = vmatmul.mubr.f32.gmra.mrb[0].mxu0 %v1967
    %v2041 = vpop.f32.mrb[0].mxu0
    %v2042 = vadd.f32 0.0, %v2041
    %v2043 = vpop.f32.mrb[0].mxu0
    %2044 = vmatprep.mubr.f32.mxu0 0.0
    %2045 = vmatmul.mubr.f32.gmra.mrb[0].mxu0 %v1972
    %v2046 = vpop.f32.mrb[0].mxu0
    %v2047 = vadd.f32 0.0, %v2046
    %v2048 = vpop.f32.mrb[0].mxu0
    %2049 = vdwg.mxu0
    %v2052 = vcombine.high %v2042, %v2042
    %v2054 = vunpack.c.l.s4 1966171168
    %v2055 = vunpack.c.0.s8 %v2054
    %v2056 = vlaneseq
    %v2057 = vshrl.u32 %v2056, 7
    %v2058 = vsub.s32 %v2055, %v2057
    %v2059 = vrot.slane %v2042, %v2058
    %v2061 = vunpack.c.l.s4 1966171168
    %v2062 = vunpack.c.0.s8 %v2061
    %v2063 = vlaneseq
    %v2064 = vshrl.u32 %v2063, 7
    %v2065 = vsub.s32 %v2062, %v2064
    %v2066 = vrot.slane %v2052, %v2065
    %v2067 = vcombine.high %v2059, %v2059
    %v2068 = vcombine.high %v2066, %v2066
    %v2070 = vunpack.c.l.s4 1966171168
    %v2071 = vunpack.c.0.s8 %v2070
    %v2072 = vlaneseq
    %v2073 = vshrl.u32 %v2072, 7
    %v2074 = vsub.s32 %v2071, %v2073
    %v2075 = vrot.slane %v2059, %v2074
    %v2077 = vunpack.c.l.s4 1966171168
    %v2078 = vunpack.c.0.s8 %v2077
    %v2079 = vlaneseq
    %v2080 = vshrl.u32 %v2079, 7
    %v2081 = vsub.s32 %v2078, %v2080
    %v2082 = vrot.slane %v2066, %v2081
    %v2084 = vunpack.c.l.s4 1966171168
    %v2085 = vunpack.c.0.s8 %v2084
    %v2086 = vlaneseq
    %v2087 = vshrl.u32 %v2086, 7
    %v2088 = vsub.s32 %v2085, %v2087
    %v2089 = vrot.slane %v2067, %v2088
    %v2091 = vunpack.c.l.s4 1966171168
    %v2092 = vunpack.c.0.s8 %v2091
    %v2093 = vlaneseq
    %v2094 = vshrl.u32 %v2093, 7
    %v2095 = vsub.s32 %v2092, %v2094
    %v2096 = vrot.slane %v2068, %v2095
    %v2097 = vcombine.high %v2075, %v2075
    %v2098 = vcombine.high %v2082, %v2082
    %v2099 = vcombine.high %v2089, %v2089
    %v2100 = vcombine.high %v2096, %v2096
    %v2101 = vcombine.high %v2047, %v2047
    %v2103 = vunpack.c.l.s4 1966171168
    %v2104 = vunpack.c.0.s8 %v2103
    %v2105 = vlaneseq
    %v2106 = vshrl.u32 %v2105, 7
    %v2107 = vsub.s32 %v2104, %v2106
    %v2108 = vrot.slane %v2047, %v2107
    %v2110 = vunpack.c.l.s4 1966171168
    %v2111 = vunpack.c.0.s8 %v2110
    %v2112 = vlaneseq
    %v2113 = vshrl.u32 %v2112, 7
    %v2114 = vsub.s32 %v2111, %v2113
    %v2115 = vrot.slane %v2101, %v2114
    %v2116 = vcombine.high %v2108, %v2108
    %v2117 = vcombine.high %v2115, %v2115
    %v2119 = vunpack.c.l.s4 1966171168
    %v2120 = vunpack.c.0.s8 %v2119
    %v2121 = vlaneseq
    %v2122 = vshrl.u32 %v2121, 7
    %v2123 = vsub.s32 %v2120, %v2122
    %v2124 = vrot.slane %v2108, %v2123
    %v2126 = vunpack.c.l.s4 1966171168
    %v2127 = vunpack.c.0.s8 %v2126
    %v2128 = vlaneseq
    %v2129 = vshrl.u32 %v2128, 7
    %v2130 = vsub.s32 %v2127, %v2129
    %v2131 = vrot.slane %v2115, %v2130
    %v2133 = vunpack.c.l.s4 1966171168
    %v2134 = vunpack.c.0.s8 %v2133
    %v2135 = vlaneseq
    %v2136 = vshrl.u32 %v2135, 7
    %v2137 = vsub.s32 %v2134, %v2136
    %v2138 = vrot.slane %v2116, %v2137
    %v2140 = vunpack.c.l.s4 1966171168
    %v2141 = vunpack.c.0.s8 %v2140
    %v2142 = vlaneseq
    %v2143 = vshrl.u32 %v2142, 7
    %v2144 = vsub.s32 %v2141, %v2143
    %v2145 = vrot.slane %v2117, %v2144
    %v2146 = vcombine.high %v2124, %v2124
    %v2147 = vcombine.high %v2131, %v2131
    %v2148 = vcombine.high %v2138, %v2138
    %v2149 = vcombine.high %v2145, %v2145
    %2166 = vst [vmem:[#allocation10 + $0x6] sm:$0x1] %v2075
    %2167 = vst [vmem:[#allocation10 + $0xe] sm:$0x1] %v2089
    %2168 = vst [vmem:[#allocation10 + $0x16] sm:$0x1] %v2097
    %2169 = vst [vmem:[#allocation10 + $0x1e] sm:$0x1] %v2099
    %2170 = vst [vmem:[#allocation10 + $0x26] sm:$0x1] %v2082
    %2171 = vst [vmem:[#allocation10 + $0x2e] sm:$0x1] %v2096
    %2172 = vst [vmem:[#allocation10 + $0x36] sm:$0x1] %v2098
    %2173 = vst [vmem:[#allocation10 + $0x3e] sm:$0x1] %v2100
    %2174 = vst [vmem:[#allocation10 + $0x46] sm:$0x1] %v2124
    %2175 = vst [vmem:[#allocation10 + $0x4e] sm:$0x1] %v2138
    %2176 = vst [vmem:[#allocation10 + $0x56] sm:$0x1] %v2146
    %2177 = vst [vmem:[#allocation10 + $0x5e] sm:$0x1] %v2148
    %2178 = vst [vmem:[#allocation10 + $0x66] sm:$0x1] %v2131
    %2179 = vst [vmem:[#allocation10 + $0x6e] sm:$0x1] %v2145
    %2180 = vst [vmem:[#allocation10 + $0x76] sm:$0x1] %v2147
    %2181 = vst [vmem:[#allocation10 + $0x7e] sm:$0x1] %v2149
    %s2182 = scalar_lea.vmem [#allocation8], 768
    %v2183 = vld [vmem:[%s2182] sm:$0xff]
    %v2184 = vld [vmem:[%s2182 + $0x8] sm:$0xff]
    %v2185 = vld [vmem:[%s2182 + $0x10] sm:$0xff]
    %v2186 = vld [vmem:[%s2182 + $0x18] sm:$0xff]
    %v2187 = vld [vmem:[%s2182 + $0x20] sm:$0xff]
    %v2188 = vld [vmem:[%s2182 + $0x28] sm:$0xff]
    %v2189 = vld [vmem:[%s2182 + $0x30] sm:$0xff]
    %v2190 = vld [vmem:[%s2182 + $0x38] sm:$0xff]
    %v2191 = vld [vmem:[%s2182 + $0x40] sm:$0xff]
    %v2192 = vld [vmem:[%s2182 + $0x48] sm:$0xff]
    %v2193 = vld [vmem:[%s2182 + $0x50] sm:$0xff]
    %v2194 = vld [vmem:[%s2182 + $0x58] sm:$0xff]
    %v2195 = vld [vmem:[%s2182 + $0x60] sm:$0xff]
    %v2196 = vld [vmem:[%s2182 + $0x68] sm:$0xff]
    %v2197 = vld [vmem:[%s2182 + $0x70] sm:$0xff]
    %v2198 = vld [vmem:[%s2182 + $0x78] sm:$0xff]
    %2199 = vmatprep.subr.mxu0 0.0
    %2200 = vmatpush1.msra.mxu0 %v2183
    %2201 = vmatprep.subr.mxu0 0.0
    %2202 = vmatpush1.msra.mxu0 %v2184
    %2203 = vmatprep.subr.mxu0 0.0
    %2204 = vmatpush1.msra.mxu0 %v2185
    %2205 = vmatprep.subr.mxu0 0.0
    %2206 = vmatpush1.msra.mxu0 %v2186
    %2207 = vmatprep.subr.mxu0 0.0
    %2208 = vmatpush1.msra.mxu0 %v2187
    %2209 = vmatprep.subr.mxu0 0.0
    %2210 = vmatpush1.msra.mxu0 %v2188
    %2211 = vmatprep.subr.mxu0 0.0
    %2212 = vmatpush1.msra.mxu0 %v2189
    %2213 = vmatprep.subr.mxu0 0.0
    %2214 = vmatpush1.msra.mxu0 %v2190
    %2215 = vmatprep.subr.mxu0 0.0
    %2216 = vmatpush1.msra.mxu0 %v2191
    %2217 = vmatprep.subr.mxu0 0.0
    %2218 = vmatpush1.msra.mxu0 %v2192
    %2219 = vmatprep.subr.mxu0 0.0
    %2220 = vmatpush1.msra.mxu0 %v2193
    %2221 = vmatprep.subr.mxu0 0.0
    %2222 = vmatpush1.msra.mxu0 %v2194
    %2223 = vmatprep.subr.mxu0 0.0
    %2224 = vmatpush1.msra.mxu0 %v2195
    %2225 = vmatprep.subr.mxu0 0.0
    %2226 = vmatpush1.msra.mxu0 %v2196
    %2227 = vmatprep.subr.mxu0 0.0
    %2228 = vmatpush1.msra.mxu0 %v2197
    %2229 = vmatprep.subr.mxu0 0.0
    %2230 = vmatpush1.msra.mxu0 %v2198
    %2231 = vmatprep.subr.mxu0 0.0
    %2232 = vmatpush1.msra.mxu0 0.0
    %2233 = vmatprep.subr.mxu0 0.0
    %2234 = vmatpush1.msra.mxu0 0.0
    %2235 = vmatprep.subr.mxu0 0.0
    %2236 = vmatpush1.msra.mxu0 0.0
    %2237 = vmatprep.subr.mxu0 0.0
    %2238 = vmatpush1.msra.mxu0 0.0
    %2239 = vmatprep.subr.mxu0 0.0
    %2240 = vmatpush1.msra.mxu0 0.0
    %2241 = vmatprep.subr.mxu0 0.0
    %2242 = vmatpush1.msra.mxu0 0.0
    %2243 = vmatprep.subr.mxu0 0.0
    %2244 = vmatpush1.msra.mxu0 0.0
    %2245 = vmatprep.subr.mxu0 0.0
    %2246 = vmatpush1.msra.mxu0 0.0
    %2247 = vmatprep.subr.mxu0 0.0
    %2248 = vmatpush1.msra.mxu0 0.0
    %2249 = vmatprep.subr.mxu0 0.0
    %2250 = vmatpush1.msra.mxu0 0.0
    %2251 = vmatprep.subr.mxu0 0.0
    %2252 = vmatpush1.msra.mxu0 0.0
    %2253 = vmatprep.subr.mxu0 0.0
    %2254 = vmatpush1.msra.mxu0 0.0
    %2255 = vmatprep.subr.mxu0 0.0
    %2256 = vmatpush1.msra.mxu0 0.0
    %2257 = vmatprep.subr.mxu0 0.0
    %2258 = vmatpush1.msra.mxu0 0.0
    %2259 = vmatprep.subr.mxu0 0.0
    %2260 = vmatpush1.msra.mxu0 0.0
    %2261 = vmatprep.subr.mxu0 0.0
    %2262 = vmatpush1.msra.mxu0 0.0
    %2263 = vmatprep.mubr.f32.mxu0 0.0
    %2264 = vmatmul.mubr.f32.gmra.mrb[0].mxu0 %v1967
    %v2265 = vpop.f32.mrb[0].mxu0
    %v2266 = vadd.f32 0.0, %v2265
    %v2267 = vpop.f32.mrb[0].mxu0
    %2268 = vmatprep.mubr.f32.mxu0 0.0
    %2269 = vmatmul.mubr.f32.gmra.mrb[0].mxu0 %v1972
    %v2270 = vpop.f32.mrb[0].mxu0
    %v2271 = vadd.f32 0.0, %v2270
    %v2272 = vpop.f32.mrb[0].mxu0
    %2273 = vdwg.mxu0
    %2274 = vmatprep.subr.mxu0 0.0
    %2275 = vmatpush1.msra.mxu0 %v73
    %2276 = vmatprep.subr.mxu0 0.0
    %2277 = vmatpush1.msra.mxu0 %v74
    %2278 = vmatprep.subr.mxu0 0.0
    %2279 = vmatpush1.msra.mxu0 %v75
    %2280 = vmatprep.subr.mxu0 0.0
    %2281 = vmatpush1.msra.mxu0 %v76
    %2282 = vmatprep.subr.mxu0 0.0
    %2283 = vmatpush1.msra.mxu0 %v77
    %2284 = vmatprep.subr.mxu0 0.0
    %2285 = vmatpush1.msra.mxu0 %v78
    %2286 = vmatprep.subr.mxu0 0.0
    %2287 = vmatpush1.msra.mxu0 %v79
    %2288 = vmatprep.subr.mxu0 0.0
    %2289 = vmatpush1.msra.mxu0 %v80
    %2290 = vmatprep.subr.mxu0 0.0
    %2291 = vmatpush1.msra.mxu0 %v81
    %2292 = vmatprep.subr.mxu0 0.0
    %2293 = vmatpush1.msra.mxu0 %v82
    %2294 = vmatprep.subr.mxu0 0.0
    %2295 = vmatpush1.msra.mxu0 %v83
    %2296 = vmatprep.subr.mxu0 0.0
    %2297 = vmatpush1.msra.mxu0 %v84
    %2298 = vmatprep.subr.mxu0 0.0
    %2299 = vmatpush1.msra.mxu0 %v85
    %2300 = vmatprep.subr.mxu0 0.0
    %2301 = vmatpush1.msra.mxu0 %v86
    %2302 = vmatprep.subr.mxu0 0.0
    %2303 = vmatpush1.msra.mxu0 %v87
    %2304 = vmatprep.subr.mxu0 0.0
    %2305 = vmatpush1.msra.mxu0 %v88
    %2306 = vmatprep.subr.mxu0 0.0
    %2307 = vmatpush1.msra.mxu0 0.0
    %2308 = vmatprep.subr.mxu0 0.0
    %2309 = vmatpush1.msra.mxu0 0.0
    %2310 = vmatprep.subr.mxu0 0.0
    %2311 = vmatpush1.msra.mxu0 0.0
    %2312 = vmatprep.subr.mxu0 0.0
    %2313 = vmatpush1.msra.mxu0 0.0
    %2314 = vmatprep.subr.mxu0 0.0
    %2315 = vmatpush1.msra.mxu0 0.0
    %2316 = vmatprep.subr.mxu0 0.0
    %2317 = vmatpush1.msra.mxu0 0.0
    %2318 = vmatprep.subr.mxu0 0.0
    %2319 = vmatpush1.msra.mxu0 0.0
    %2320 = vmatprep.subr.mxu0 0.0
    %2321 = vmatpush1.msra.mxu0 0.0
    %2322 = vmatprep.subr.mxu0 0.0
    %2323 = vmatpush1.msra.mxu0 0.0
    %2324 = vmatprep.subr.mxu0 0.0
    %2325 = vmatpush1.msra.mxu0 0.0
    %2326 = vmatprep.subr.mxu0 0.0
    %2327 = vmatpush1.msra.mxu0 0.0
    %2328 = vmatprep.subr.mxu0 0.0
    %2329 = vmatpush1.msra.mxu0 0.0
    %2330 = vmatprep.subr.mxu0 0.0
    %2331 = vmatpush1.msra.mxu0 0.0
    %2332 = vmatprep.subr.mxu0 0.0
    %2333 = vmatpush1.msra.mxu0 0.0
    %2334 = vmatprep.subr.mxu0 0.0
    %2335 = vmatpush1.msra.mxu0 0.0
    %2336 = vmatprep.subr.mxu0 0.0
    %2337 = vmatpush1.msra.mxu0 0.0
    %2338 = vmatprep.mubr.f32.mxu0 0.0
    %2339 = vmatmul.mubr.f32.gmra.mrb[0].mxu0 %v2266
    %v2340 = vpop.f32.mrb[0].mxu0
    %v2341 = vadd.f32 0.0, %v2340
    %v2342 = vpop.f32.mrb[0].mxu0
    %2343 = vmatprep.mubr.f32.mxu0 0.0
    %2344 = vmatmul.mubr.f32.gmra.mrb[0].mxu0 %v2271
    %v2345 = vpop.f32.mrb[0].mxu0
    %v2346 = vadd.f32 0.0, %v2345
    %v2347 = vpop.f32.mrb[0].mxu0
    %2348 = vdwg.mxu0
    %v2351 = vcombine.high %v2341, %v2341
    %v2353 = vunpack.c.l.s4 1966171168
    %v2354 = vunpack.c.0.s8 %v2353
    %v2355 = vlaneseq
    %v2356 = vshrl.u32 %v2355, 7
    %v2357 = vsub.s32 %v2354, %v2356
    %v2358 = vrot.slane %v2341, %v2357
    %v2360 = vunpack.c.l.s4 1966171168
    %v2361 = vunpack.c.0.s8 %v2360
    %v2362 = vlaneseq
    %v2363 = vshrl.u32 %v2362, 7
    %v2364 = vsub.s32 %v2361, %v2363
    %v2365 = vrot.slane %v2351, %v2364
    %v2366 = vcombine.high %v2358, %v2358
    %v2367 = vcombine.high %v2365, %v2365
    %v2369 = vunpack.c.l.s4 1966171168
    %v2370 = vunpack.c.0.s8 %v2369
    %v2371 = vlaneseq
    %v2372 = vshrl.u32 %v2371, 7
    %v2373 = vsub.s32 %v2370, %v2372
    %v2374 = vrot.slane %v2358, %v2373
    %v2376 = vunpack.c.l.s4 1966171168
    %v2377 = vunpack.c.0.s8 %v2376
    %v2378 = vlaneseq
    %v2379 = vshrl.u32 %v2378, 7
    %v2380 = vsub.s32 %v2377, %v2379
    %v2381 = vrot.slane %v2365, %v2380
    %v2383 = vunpack.c.l.s4 1966171168
    %v2384 = vunpack.c.0.s8 %v2383
    %v2385 = vlaneseq
    %v2386 = vshrl.u32 %v2385, 7
    %v2387 = vsub.s32 %v2384, %v2386
    %v2388 = vrot.slane %v2366, %v2387
    %v2390 = vunpack.c.l.s4 1966171168
    %v2391 = vunpack.c.0.s8 %v2390
    %v2392 = vlaneseq
    %v2393 = vshrl.u32 %v2392, 7
    %v2394 = vsub.s32 %v2391, %v2393
    %v2395 = vrot.slane %v2367, %v2394
    %v2396 = vcombine.high %v2374, %v2374
    %v2397 = vcombine.high %v2381, %v2381
    %v2398 = vcombine.high %v2388, %v2388
    %v2399 = vcombine.high %v2395, %v2395
    %v2400 = vcombine.high %v2346, %v2346
    %v2402 = vunpack.c.l.s4 1966171168
    %v2403 = vunpack.c.0.s8 %v2402
    %v2404 = vlaneseq
    %v2405 = vshrl.u32 %v2404, 7
    %v2406 = vsub.s32 %v2403, %v2405
    %v2407 = vrot.slane %v2346, %v2406
    %v2409 = vunpack.c.l.s4 1966171168
    %v2410 = vunpack.c.0.s8 %v2409
    %v2411 = vlaneseq
    %v2412 = vshrl.u32 %v2411, 7
    %v2413 = vsub.s32 %v2410, %v2412
    %v2414 = vrot.slane %v2400, %v2413
    %v2415 = vcombine.high %v2407, %v2407
    %v2416 = vcombine.high %v2414, %v2414
    %v2418 = vunpack.c.l.s4 1966171168
    %v2419 = vunpack.c.0.s8 %v2418
    %v2420 = vlaneseq
    %v2421 = vshrl.u32 %v2420, 7
    %v2422 = vsub.s32 %v2419, %v2421
    %v2423 = vrot.slane %v2407, %v2422
    %v2425 = vunpack.c.l.s4 1966171168
    %v2426 = vunpack.c.0.s8 %v2425
    %v2427 = vlaneseq
    %v2428 = vshrl.u32 %v2427, 7
    %v2429 = vsub.s32 %v2426, %v2428
    %v2430 = vrot.slane %v2414, %v2429
    %v2432 = vunpack.c.l.s4 1966171168
    %v2433 = vunpack.c.0.s8 %v2432
    %v2434 = vlaneseq
    %v2435 = vshrl.u32 %v2434, 7
    %v2436 = vsub.s32 %v2433, %v2435
    %v2437 = vrot.slane %v2415, %v2436
    %v2439 = vunpack.c.l.s4 1966171168
    %v2440 = vunpack.c.0.s8 %v2439
    %v2441 = vlaneseq
    %v2442 = vshrl.u32 %v2441, 7
    %v2443 = vsub.s32 %v2440, %v2442
    %v2444 = vrot.slane %v2416, %v2443
    %v2445 = vcombine.high %v2423, %v2423
    %v2446 = vcombine.high %v2430, %v2430
    %v2447 = vcombine.high %v2437, %v2437
    %v2448 = vcombine.high %v2444, %v2444
    %2465 = vst [vmem:[#allocation10 + $0x7] sm:$0x1] %v2374
    %2466 = vst [vmem:[#allocation10 + $0xf] sm:$0x1] %v2388
    %2467 = vst [vmem:[#allocation10 + $0x17] sm:$0x1] %v2396
    %2468 = vst [vmem:[#allocation10 + $0x1f] sm:$0x1] %v2398
    %2469 = vst [vmem:[#allocation10 + $0x27] sm:$0x1] %v2381
    %2470 = vst [vmem:[#allocation10 + $0x2f] sm:$0x1] %v2395
    %2471 = vst [vmem:[#allocation10 + $0x37] sm:$0x1] %v2397
    %2472 = vst [vmem:[#allocation10 + $0x3f] sm:$0x1] %v2399
    %2473 = vst [vmem:[#allocation10 + $0x47] sm:$0x1] %v2423
    %2474 = vst [vmem:[#allocation10 + $0x4f] sm:$0x1] %v2437
    %2475 = vst [vmem:[#allocation10 + $0x57] sm:$0x1] %v2445
    %2476 = vst [vmem:[#allocation10 + $0x5f] sm:$0x1] %v2447
    %2477 = vst [vmem:[#allocation10 + $0x67] sm:$0x1] %v2430
    %2478 = vst [vmem:[#allocation10 + $0x6f] sm:$0x1] %v2444
    %2479 = vst [vmem:[#allocation10 + $0x77] sm:$0x1] %v2446
    %2480 = vst [vmem:[#allocation10 + $0x7f] sm:$0x1] %v2448
    // Predicated region
    $region34: #{tpu_custom_call.1} parent=1 // pred_check
      _
    $region35: #{tpu_custom_call.1} parent=1 // pred_check_branch
      %2482 = sbr.rel (0) target = $region37
    $region36: #{tpu_custom_call.1} parent=1 // pred_region
      %s2484 = ssub.s32 2048, 2048
      %2485 = vsyncadd [#allocation4], %s2484
      %s2486 = sshll.u32 [#allocation10], 4
      %s2487 = int_to_ptr.vmem [resolvable:$true] %s2486
      %2492 = dma.vmem_to_hbm [thread:$0]  %s2487, 2048, %s4, [#allocation4], 128, 128, 8
    $region37: #{tpu_custom_call.1} parent=1 // pred_fallthru
      _
    // Predicated region
    $region38: #{tpu_custom_call.1} parent=1 // pred_check
      _
    $region39: #{tpu_custom_call.1} parent=1 // pred_check_branch
      %2494 = sbr.rel (0) target = $region41
    $region40: #{tpu_custom_call.1} parent=1 // pred_region
      %2495 = dma.done [#allocation4], 2048
    $region41: #{tpu_custom_call.1} parent=1 // pred_fallthru
      _
    %2496 = vsyncpa [#allocation3], 1
    %2497 = vsyncpa [#allocation6], 1
    %2498 = vsyncpa [#allocation9], 1
    %2499 = vsyncpa [#allocation4], 1

</llo_original>
